<compile_context>
chip_gen: v7x
topology: tpu7x:2x2x1
jax: 0.10.0
libtpu: 0.0.40
codegen_flags: <defaults>
</compile_context>

<pallas_src>
import functools

import jax
import jax.numpy as jnp
from jax.experimental import pallas as pl
from jax.experimental.pallas import tpu as pltpu


# ----------------------------------------------------------------------------
# Kernel
# ----------------------------------------------------------------------------
def anglecnn_kernel(
    x_ref,                      # (TB, TL, C_in)  compute_dtype
    lmask_ref,                  # (TL, 1) f32 — 1.0 for real L positions, 0.0 pad
    w1_ref, b1_ref,             # (C_in, 64) f32, (1, 64) f32
    w2_ref, b2_ref,             # (64, 128)  compute_dtype (BN1-folded), f32 bias
    w3_ref, b3_ref,             # (128, 256) compute_dtype (BN2-folded), f32 bias
    wf1_ref, bf1_ref,           # (256, 128) compute_dtype (BN3-folded), f32 bias
    wf2_ref, bf2_ref,           # (128, 1)   compute_dtype, f32 bias
    o_ref,                      # (1, TB, 1) f32
    acc_ref,                    # scratch (TB, 256) f32 — per-batch pooled sums
    *, inv_l, mask_l, compute_dtype, conv1_on_vpu,
):
    li = pl.program_id(1)

    @pl.when(li == 0)
    def _init():
        acc_ref[...] = jnp.zeros_like(acc_ref)

    xt = x_ref[...]                         # (TB, TL, C_in)
    tb, tl, cin = xt.shape
    x2d = xt.reshape(tb * tl, cin)          # one 2-D matmul per layer, M = TB*TL

    # conv1 (k=1) -> ReLU.  K == C_in is tiny (6): run it as C_in broadcast
    # FMAs on the VPU instead of wasting a full MXU pass (BN1 folded into w2/b2).
    if conv1_on_vpu:
        xf = x2d.astype(jnp.float32)
        w1 = w1_ref[...]                    # (C_in, 64) f32
        h = xf[:, 0:1] * w1[0:1, :]
        for c in range(1, cin):
            h = h + xf[:, c:c + 1] * w1[c:c + 1, :]
    else:
        h = jnp.dot(x2d, w1_ref[...].astype(compute_dtype),
                    preferred_element_type=jnp.float32)
    h = jnp.maximum(h + b1_ref[...], 0.0)

    # conv2 (k=1, BN1-folded) -> ReLU      (BN2 folded into w3/b3)
    h = jnp.dot(h.astype(compute_dtype), w2_ref[...],
                preferred_element_type=jnp.float32)
    h = jnp.maximum(h + b2_ref[...], 0.0)

    # conv3 (k=1, BN2-folded) -> ReLU      (BN3 folded into wf1/bf1; legal
    # because the mean-pool is linear)
    h = jnp.dot(h.astype(compute_dtype), w3_ref[...],
                preferred_element_type=jnp.float32)
    h = jnp.maximum(h + b3_ref[...], 0.0)   # (TB*TL, 256) f32

    # AdaptiveAvgPool1d(1): accumulate per-batch partial sums over this L tile.
    h3 = h.reshape(tb, tl, -1)
    if mask_l:
        # L was zero-padded in the wrapper; padded positions must not count in
        # the mean (conv(0) != 0 because of biases/ReLU) -> zero them out.
        h3 = h3 * lmask_ref[...]            # (TL,1) broadcast over batch, chans
    acc_ref[...] += h3.sum(axis=1)

    @pl.when(li == pl.num_programs(1) - 1)
    def _finalize():
        pooled = acc_ref[...] * inv_l       # (TB, 256) f32 — mean over TRUE L
        # fc1 (BN3-folded) -> ReLU -> Dropout(identity in eval) -> fc2
        f = jnp.dot(pooled.astype(compute_dtype), wf1_ref[...],
                    preferred_element_type=jnp.float32)
        f = jnp.maximum(f + bf1_ref[...], 0.0)
        out = jnp.dot(f.astype(compute_dtype), wf2_ref[...],
                      preferred_element_type=jnp.float32)
        o_ref[...] = (out + bf2_ref[...]).astype(o_ref.dtype).reshape(1, tb, 1)


# ----------------------------------------------------------------------------
# Parameter construction / BN folding (wrapper-side)
# ----------------------------------------------------------------------------
def init_params(key, c_in=6):
    """Deterministic synthetic parameters matching AngleCNN's shapes."""
    ks = jax.random.split(key, 16)

    def u(k, shape, scale=0.1):
        return (jax.random.uniform(k, shape, jnp.float32) - 0.5) * 2.0 * scale

    params = {}
    # Conv1d weights in PyTorch are (out, in, 1); stored transposed (in, out).
    params["w1"] = u(ks[0], (c_in, 64));  params["b1"] = u(ks[1], (1, 64))
    params["w2"] = u(ks[2], (64, 128));   params["b2"] = u(ks[3], (1, 128))
    params["w3"] = u(ks[4], (128, 256));  params["b3"] = u(ks[5], (1, 256))

    def bn(kg, kb, km, kv, n):
        gamma = 1.0 + u(kg, (1, n))
        beta = u(kb, (1, n))
        mean = u(km, (1, n))
        var = 1.0 + jnp.abs(u(kv, (1, n)))
        eps = 1e-5
        scale = gamma / jnp.sqrt(var + eps)
        shift = beta - mean * scale
        return scale.astype(jnp.float32), shift.astype(jnp.float32)

    params["s1"], params["t1"] = bn(ks[6], ks[7], ks[8], ks[9], 64)
    k2 = jax.random.split(ks[10], 4)
    params["s2"], params["t2"] = bn(k2[0], k2[1], k2[2], k2[3], 128)
    k3 = jax.random.split(ks[11], 4)
    params["s3"], params["t3"] = bn(k3[0], k3[1], k3[2], k3[3], 256)
    # FC layers (stored transposed: (in, out)).
    params["wf1"] = u(ks[12], (256, 128)); params["bf1"] = u(ks[13], (1, 128))
    params["wf2"] = u(ks[14], (128, 1));   params["bf2"] = u(ks[15], (1, 1))
    return params


def _fold_bn(params):
    """Fold eval-mode BatchNorm scale/shift into the NEXT layer's weights/bias.

    y_next = (s*h + t) @ W + b  =  h @ (s.T * W) + (b + t @ W)
    The BN3 fold into fc1 is legal because mean-pool is linear.
    """
    s1, t1 = params["s1"], params["t1"]
    s2, t2 = params["s2"], params["t2"]
    s3, t3 = params["s3"], params["t3"]
    return {
        "w1": params["w1"],
        "b1": params["b1"],
        "w2": params["w2"] * s1.T,
        "b2": params["b2"] + t1 @ params["w2"],
        "w3": params["w3"] * s2.T,
        "b3": params["b3"] + t2 @ params["w3"],
        "wf1": params["wf1"] * s3.T,
        "bf1": params["bf1"] + t3 @ params["wf1"],
        "wf2": params["wf2"],
        "bf2": params["bf2"],
    }


# ----------------------------------------------------------------------------
# Tiling / budget helpers
# ----------------------------------------------------------------------------
def _round_up(x, m):
    return ((x + m - 1) // m) * m


def _pick_batch_tiling(B):
    """Return (tile_b, padded_B).  Guarantees >= 2 batch tiles whenever B >= 2
    so dimension_semantics=('parallel', ...) can use both v7x TensorCores."""
    if B <= 1:
        return 1, 1
    if B < 16:
        tb = (B + 1) // 2
        return tb, _round_up(B, tb)
    tb = 8
    return tb, _round_up(B, tb)


def _pick_length_tiling(L, tb, max_rows, sublane_mult):
    """Return (tile_l, padded_L) with tile_l % sublane_mult == 0 and
    tile_b * tile_l <= max_rows."""
    cap = max(sublane_mult,
              ((max_rows // max(tb, 1)) // sublane_mult) * sublane_mult)
    l_pad = _round_up(L, sublane_mult)
    if l_pad <= cap:
        return l_pad, l_pad
    return cap, _round_up(L, cap)


def _physical_vmem_bytes():
    """Per-TensorCore VMEM capacity; conservative fallback if unavailable."""
    try:
        info = pltpu.get_tpu_info()
        for attr in ("vmem_capacity_bytes", "vmem_bytes", "vmem_size_bytes"):
            v = getattr(info, attr, None)
            if isinstance(v, (int, float)) and v > 0:
                return int(v)
    except Exception:
        pass
    return 64 << 20     # v7x per-TensorCore VMEM (smallest of the targets)


def _vmem_limit_bytes(tb, tl, compute_dtype, cap_bytes):
    itm = jnp.dtype(compute_dtype).itemsize
    rows = tb * tl
    x_tile = rows * 128 * itm                 # input block, lane-padded to 128
    weights = (6 * 64) * 4 + (64 * 128 + 128 * 256 + 256 * 128 + 128) * itm
    biases = (64 + 128 + 256 + 128 + 1) * 4
    acts = rows * (64 + 128 + 256) * 4        # f32 intermediates (single copy)
    casts = rows * (64 + 128 + 256) * itm if itm < 4 else 0
    acc = tb * 256 * 4
    est = 2 * x_tile + 2 * (weights + biases) + acts + casts + acc + (4 << 20)
    return int(min(max(est, 16 << 20), cap_bytes))


# ----------------------------------------------------------------------------
# Wrapper
# ----------------------------------------------------------------------------
def angle_cnn_forward(x_ncl, params, *, compute_dtype=jnp.bfloat16,
                      max_rows_per_step=None, conv1_on_vpu=True):
    """x_ncl: (B, C_in, L) float32, same layout as the PyTorch module."""
    B, C, L = x_ncl.shape

    # Generation-aware budgets: v5e/v6e have 128 MiB VMEM/core, v7x has 64 MiB.
    vmem_phys = _physical_vmem_bytes()
    vmem_cap = min(int(vmem_phys * 3 // 4), 100 << 20)
    if max_rows_per_step is None:
        max_rows_per_step = 8192 if vmem_phys <= (64 << 20) else 16384

    sublane_mult = 8 if jnp.dtype(compute_dtype) == jnp.dtype(jnp.float32) else 16
    tb, b_pad = _pick_batch_tiling(B)
    tl, l_pad = _pick_length_tiling(L, tb, max_rows_per_step, sublane_mult)
    assert b_pad % tb == 0 and l_pad % tl == 0
    grid = (b_pad // tb, l_pad // tl)

    # Layout: NCL -> NLC so channels sit on the lane (last) axis; zero-pad
    # batch/length to tile multiples (masked / sliced away again below).
    x_nlc = jnp.transpose(x_ncl, (0, 2, 1)).astype(compute_dtype)
    if b_pad != B or l_pad != L:
        x_nlc = jnp.pad(x_nlc, ((0, b_pad - B), (0, l_pad - L), (0, 0)))

    # 1.0 for real L positions, 0.0 for padded ones (only applied if L padded).
    lmask = (jnp.arange(l_pad, dtype=jnp.int32) < L).astype(jnp.float32)
    lmask = lmask.reshape(l_pad, 1)

    fp = _fold_bn(params)
    # w1 stays f32 (consumed by the VPU conv1); other matmul operands go to
    # compute_dtype (bf16 by default); biases stay f32 and are added to the
    # f32 MXU accumulator.
    w1 = fp["w1"].astype(jnp.float32);     b1 = fp["b1"].astype(jnp.float32)
    w2 = fp["w2"].astype(compute_dtype);   b2 = fp["b2"].astype(jnp.float32)
    w3 = fp["w3"].astype(compute_dtype);   b3 = fp["b3"].astype(jnp.float32)
    wf1 = fp["wf1"].astype(compute_dtype); bf1 = fp["bf1"].astype(jnp.float32)
    wf2 = fp["wf2"].astype(compute_dtype); bf2 = fp["bf2"].astype(jnp.float32)

    def full_spec(arr):
        return pl.BlockSpec(arr.shape, lambda bi, li: (0,) * arr.ndim)

    in_specs = [
        pl.BlockSpec((tb, tl, C), lambda bi, li: (bi, li, 0)),
        pl.BlockSpec((tl, 1), lambda bi, li: (li, 0)),
        full_spec(w1), full_spec(b1),
        full_spec(w2), full_spec(b2),
        full_spec(w3), full_spec(b3),
        full_spec(wf1), full_spec(bf1),
        full_spec(wf2), full_spec(bf2),
    ]
    out_specs = pl.BlockSpec((1, tb, 1), lambda bi, li: (bi, 0, 0))

    kernel = functools.partial(
        anglecnn_kernel,
        inv_l=1.0 / float(L),
        mask_l=bool(l_pad != L),
        compute_dtype=compute_dtype,
        conv1_on_vpu=bool(conv1_on_vpu and C <= 8),
    )

    itm = jnp.dtype(compute_dtype).itemsize
    flops = (2 * b_pad * l_pad * (C * 64 + 64 * 128 + 128 * 256)
             + 2 * b_pad * (256 * 128 + 128))
    bytes_accessed = (b_pad * l_pad * C * itm + l_pad * 4
                      + (C * 64) * 4
                      + (64 * 128 + 128 * 256 + 256 * 128 + 128) * itm
                      + (64 + 128 + 256 + 128 + 1) * 4
                      + b_pad * 4)

    out3 = pl.pallas_call(
        kernel,
        out_shape=jax.ShapeDtypeStruct((grid[0], tb, 1), jnp.float32),
        grid_spec=pltpu.PrefetchScalarGridSpec(
            num_scalar_prefetch=0,
            grid=grid,
            in_specs=in_specs,
            out_specs=out_specs,
            scratch_shapes=[pltpu.VMEM((tb, 256), jnp.float32)],
        ),
        compiler_params=pltpu.CompilerParams(
            dimension_semantics=("parallel", "arbitrary"),
            vmem_limit_bytes=_vmem_limit_bytes(tb, tl, compute_dtype, vmem_cap),
        ),
        cost_estimate=pl.CostEstimate(
            flops=int(flops), transcendentals=0,
            bytes_accessed=int(bytes_accessed)),
    )(x_nlc, lmask, w1, b1, w2, b2, w3, b3, wf1, bf1, wf2, bf2)

    return out3.reshape(b_pad, 1)[:B]


# ----------------------------------------------------------------------------
# Pure-JAX reference (un-folded, original op order) for correctness checking
# ----------------------------------------------------------------------------
def reference_forward(x_ncl, params):
    x = jnp.transpose(x_ncl, (0, 2, 1)).astype(jnp.float32)  # (B, L, C)
    h = jnp.maximum(x @ params["w1"] + params["b1"][None], 0.0)
    h = h * params["s1"][None] + params["t1"][None]
    h = jnp.maximum(h @ params["w2"] + params["b2"][None], 0.0)
    h = h * params["s2"][None] + params["t2"][None]
    h = jnp.maximum(h @ params["w3"] + params["b3"][None], 0.0)
    h = h * params["s3"][None] + params["t3"][None]
    p = jnp.mean(h, axis=1)
    f = jnp.maximum(p @ params["wf1"] + params["bf1"], 0.0)
    return f @ params["wf2"] + params["bf2"]


if __name__ == "__main__":
    key = jax.random.PRNGKey(0)
    k_x, k_p, k_x2, k_x3 = jax.random.split(key, 4)

    C_in = 6
    params = init_params(k_p, c_in=C_in)

    # 1) f32 compute path, tiny divisible shapes (B=2 -> 2 parallel batch tiles).
    B, L = 2, 16
    x = jax.random.normal(k_x, (B, C_in, L), dtype=jnp.float32)
    ref = reference_forward(x, params)
    out = jax.block_until_ready(
        angle_cnn_forward(x, params, compute_dtype=jnp.float32))
    assert out.shape == (B, 1)
    assert jnp.allclose(out, ref, atol=1e-4, rtol=1e-4), (out, ref)

    # 1b) MXU fallback branch for conv1 — same tight tolerance.
    out_mxu = jax.block_until_ready(
        angle_cnn_forward(x, params, compute_dtype=jnp.float32,
                          conv1_on_vpu=False))
    assert jnp.allclose(out_mxu, ref, atol=1e-4, rtol=1e-4), (out_mxu, ref)

    # 2) f32 path with batch+length padding and a multi-step pooled accumulator
    #    (non-divisible B=5, L=50; small max_rows forces several L tiles).
    B2, L2 = 5, 50
    x2 = jax.random.normal(k_x2, (B2, C_in, L2), dtype=jnp.float32)
    out2 = jax.block_until_ready(
        angle_cnn_forward(x2, params, compute_dtype=jnp.float32,
                          max_rows_per_step=32))
    ref2 = reference_forward(x2, params)
    assert out2.shape == (B2, 1)
    assert jnp.allclose(out2, ref2, atol=1e-4, rtol=1e-4), (out2, ref2)

    # 3) Default bf16 matmul-operand path (f32 accumulate) — tolerance check
    #    against the f32 reference (not just finiteness).
    B3, L3 = 4, 40
    x3 = jax.random.normal(k_x3, (B3, C_in, L3), dtype=jnp.float32)
    out3 = jax.block_until_ready(angle_cnn_forward(x3, params))
    ref3 = reference_forward(x3, params)
    assert out3.shape == (B3, 1)
    assert bool(jnp.all(jnp.isfinite(out3)))
    assert jnp.allclose(out3, ref3, atol=3e-2, rtol=5e-2), (out3, ref3)

    print("KERNEL_OK")
</pallas_src>

<mosaic_0001>
module attributes {stable_mosaic.version = 11 : i64} {
  func.func @anglecnn_kernel(%arg0: i32, %arg1: i32, %arg2: memref<1x16x6xf32, #tpu.memory_space<vmem>>, %arg3: memref<16x1xf32, #tpu.memory_space<vmem>>, %arg4: memref<6x64xf32, #tpu.memory_space<vmem>>, %arg5: memref<1x64xf32, #tpu.memory_space<vmem>>, %arg6: memref<64x128xf32, #tpu.memory_space<vmem>>, %arg7: memref<1x128xf32, #tpu.memory_space<vmem>>, %arg8: memref<128x256xf32, #tpu.memory_space<vmem>>, %arg9: memref<1x256xf32, #tpu.memory_space<vmem>>, %arg10: memref<256x128xf32, #tpu.memory_space<vmem>>, %arg11: memref<1x128xf32, #tpu.memory_space<vmem>>, %arg12: memref<128x1xf32, #tpu.memory_space<vmem>>, %arg13: memref<1x1xf32, #tpu.memory_space<vmem>>, %arg14: memref<1x1x1xf32, #tpu.memory_space<vmem>>, %arg15: memref<1x256xf32, #tpu.memory_space<vmem>>) attributes {dimension_semantics = [#tpu.dimension_semantics<parallel>, #tpu.dimension_semantics<arbitrary>], iteration_bounds = array<i64: 2, 1>, scalar_prefetch = 0 : i64, scratch_operands = 1 : i64, tpu.core_type = #tpu.core_type<tc>, window_params = [{transform_indices = @transform_0, window_bounds = array<i64: 1, 16, 6>}, {transform_indices = @transform_1, window_bounds = array<i64: 16, 1>}, {pipeline_mode = #tpu.pipeline_mode<synchronous>, transform_indices = @transform_2, window_bounds = array<i64: 6, 64>}, {pipeline_mode = #tpu.pipeline_mode<synchronous>, transform_indices = @transform_3, window_bounds = array<i64: 1, 64>}, {pipeline_mode = #tpu.pipeline_mode<synchronous>, transform_indices = @transform_4, window_bounds = array<i64: 64, 128>}, {pipeline_mode = #tpu.pipeline_mode<synchronous>, transform_indices = @transform_5, window_bounds = array<i64: 1, 128>}, {pipeline_mode = #tpu.pipeline_mode<synchronous>, transform_indices = @transform_6, window_bounds = array<i64: 128, 256>}, {pipeline_mode = #tpu.pipeline_mode<synchronous>, transform_indices = @transform_7, window_bounds = array<i64: 1, 256>}, {pipeline_mode = #tpu.pipeline_mode<synchronous>, transform_indices = @transform_8, window_bounds = array<i64: 256, 128>}, {pipeline_mode = #tpu.pipeline_mode<synchronous>, transform_indices = @transform_9, window_bounds = array<i64: 1, 128>}, {pipeline_mode = #tpu.pipeline_mode<synchronous>, transform_indices = @transform_10, window_bounds = array<i64: 128, 1>}, {pipeline_mode = #tpu.pipeline_mode<synchronous>, transform_indices = @transform_11, window_bounds = array<i64: 1, 1>}, {transform_indices = @transform_12, window_bounds = array<i64: 1, 1, 1>}]} {
    %c0_i32 = arith.constant 0 : i32
    %0 = arith.cmpi eq, %arg1, %c0_i32 : i32
    %1 = arith.extui %0 : i1 to i32
    %c0_i32_0 = arith.constant 0 : i32
    %2 = arith.cmpi ne, %1, %c0_i32_0 : i32
    scf.if %2 {
      %cst_26 = arith.constant 0.000000e+00 : f32
      %68 = vector.broadcast %cst_26 : f32 to vector<1x256xf32>
      %c0_27 = arith.constant 0 : index
      %c0_28 = arith.constant 0 : index
      %69 = vector.load %arg15[%c0_27, %c0_28] : memref<1x256xf32, #tpu.memory_space<vmem>>, vector<1x256xf32>
      tpu.vector_store %arg15[%c0_27, %c0_28], %68 {strides = array<i32>} : memref<1x256xf32, #tpu.memory_space<vmem>>, vector<1x256xf32>,
    } else {
    }
    %c0 = arith.constant 0 : index
    %c0_1 = arith.constant 0 : index
    %c0_2 = arith.constant 0 : index
    %3 = vector.load %arg2[%c0, %c0_1, %c0_2] : memref<1x16x6xf32, #tpu.memory_space<vmem>>, vector<1x16x6xf32>
    %4 = vector.shape_cast %3 : vector<1x16x6xf32> to vector<16x6xf32>
    %c0_3 = arith.constant 0 : index
    %c0_4 = arith.constant 0 : index
    %5 = vector.load %arg4[%c0_3, %c0_4] : memref<6x64xf32, #tpu.memory_space<vmem>>, vector<6x64xf32>
    %6 = vector.extract_strided_slice %4 {offsets = [0, 0], sizes = [16, 1], strides = [1, 1]} : vector<16x6xf32> to vector<16x1xf32>
    %7 = vector.extract_strided_slice %5 {offsets = [0, 0], sizes = [1, 64], strides = [1, 1]} : vector<6x64xf32> to vector<1x64xf32>
    %8 = vector.broadcast %6 : vector<16x1xf32> to vector<16x64xf32>
    %9 = vector.broadcast %7 : vector<1x64xf32> to vector<16x64xf32>
    %10 = arith.mulf %8, %9 : vector<16x64xf32>
    %11 = vector.extract_strided_slice %4 {offsets = [0, 1], sizes = [16, 1], strides = [1, 1]} : vector<16x6xf32> to vector<16x1xf32>
    %12 = vector.extract_strided_slice %5 {offsets = [1, 0], sizes = [1, 64], strides = [1, 1]} : vector<6x64xf32> to vector<1x64xf32>
    %13 = vector.broadcast %11 : vector<16x1xf32> to vector<16x64xf32>
    %14 = vector.broadcast %12 : vector<1x64xf32> to vector<16x64xf32>
    %15 = arith.mulf %13, %14 : vector<16x64xf32>
    %16 = arith.addf %10, %15 : vector<16x64xf32>
    %17 = vector.extract_strided_slice %4 {offsets = [0, 2], sizes = [16, 1], strides = [1, 1]} : vector<16x6xf32> to vector<16x1xf32>
    %18 = vector.extract_strided_slice %5 {offsets = [2, 0], sizes = [1, 64], strides = [1, 1]} : vector<6x64xf32> to vector<1x64xf32>
    %19 = vector.broadcast %17 : vector<16x1xf32> to vector<16x64xf32>
    %20 = vector.broadcast %18 : vector<1x64xf32> to vector<16x64xf32>
    %21 = arith.mulf %19, %20 : vector<16x64xf32>
    %22 = arith.addf %16, %21 : vector<16x64xf32>
    %23 = vector.extract_strided_slice %4 {offsets = [0, 3], sizes = [16, 1], strides = [1, 1]} : vector<16x6xf32> to vector<16x1xf32>
    %24 = vector.extract_strided_slice %5 {offsets = [3, 0], sizes = [1, 64], strides = [1, 1]} : vector<6x64xf32> to vector<1x64xf32>
    %25 = vector.broadcast %23 : vector<16x1xf32> to vector<16x64xf32>
    %26 = vector.broadcast %24 : vector<1x64xf32> to vector<16x64xf32>
    %27 = arith.mulf %25, %26 : vector<16x64xf32>
    %28 = arith.addf %22, %27 : vector<16x64xf32>
    %29 = vector.extract_strided_slice %4 {offsets = [0, 4], sizes = [16, 1], strides = [1, 1]} : vector<16x6xf32> to vector<16x1xf32>
    %30 = vector.extract_strided_slice %5 {offsets = [4, 0], sizes = [1, 64], strides = [1, 1]} : vector<6x64xf32> to vector<1x64xf32>
    %31 = vector.broadcast %29 : vector<16x1xf32> to vector<16x64xf32>
    %32 = vector.broadcast %30 : vector<1x64xf32> to vector<16x64xf32>
    %33 = arith.mulf %31, %32 : vector<16x64xf32>
    %34 = arith.addf %28, %33 : vector<16x64xf32>
    %35 = vector.extract_strided_slice %4 {offsets = [0, 5], sizes = [16, 1], strides = [1, 1]} : vector<16x6xf32> to vector<16x1xf32>
    %36 = vector.extract_strided_slice %5 {offsets = [5, 0], sizes = [1, 64], strides = [1, 1]} : vector<6x64xf32> to vector<1x64xf32>
    %37 = vector.broadcast %35 : vector<16x1xf32> to vector<16x64xf32>
    %38 = vector.broadcast %36 : vector<1x64xf32> to vector<16x64xf32>
    %39 = arith.mulf %37, %38 : vector<16x64xf32>
    %40 = arith.addf %34, %39 : vector<16x64xf32>
    %c0_5 = arith.constant 0 : index
    %c0_6 = arith.constant 0 : index
    %41 = vector.load %arg5[%c0_5, %c0_6] : memref<1x64xf32, #tpu.memory_space<vmem>>, vector<1x64xf32>
    %42 = vector.broadcast %41 : vector<1x64xf32> to vector<16x64xf32>
    %43 = arith.addf %40, %42 : vector<16x64xf32>
    %cst = arith.constant 0.000000e+00 : f32
    %44 = vector.broadcast %cst : f32 to vector<16x64xf32>
    %45 = arith.maximumf %43, %44 : vector<16x64xf32>
    %c0_7 = arith.constant 0 : index
    %c0_8 = arith.constant 0 : index
    %46 = vector.load %arg6[%c0_7, %c0_8] : memref<64x128xf32, #tpu.memory_space<vmem>>, vector<64x128xf32>
    %cst_9 = arith.constant dense<0.000000e+00> : vector<16x128xf32>
    %47 = tpu.matmul %45, %46, %cst_9 {dimension_numbers = #tpu.dot_dimension_numbers<[1], [0], [0], [1], [0, 0, 1, 1], [], []>} : vector<16x64xf32>, vector<64x128xf32>, vector<16x128xf32> -> vector<16x128xf32>
    %c0_10 = arith.constant 0 : index
    %c0_11 = arith.constant 0 : index
    %48 = vector.load %arg7[%c0_10, %c0_11] : memref<1x128xf32, #tpu.memory_space<vmem>>, vector<1x128xf32>
    %49 = vector.broadcast %48 : vector<1x128xf32> to vector<16x128xf32>
    %50 = arith.addf %47, %49 : vector<16x128xf32>
    %cst_12 = arith.constant 0.000000e+00 : f32
    %51 = vector.broadcast %cst_12 : f32 to vector<16x128xf32>
    %52 = arith.maximumf %50, %51 : vector<16x128xf32>
    %c0_13 = arith.constant 0 : index
    %c0_14 = arith.constant 0 : index
    %53 = vector.load %arg8[%c0_13, %c0_14] : memref<128x256xf32, #tpu.memory_space<vmem>>, vector<128x256xf32>
    %cst_15 = arith.constant dense<0.000000e+00> : vector<16x256xf32>
    %54 = tpu.matmul %52, %53, %cst_15 {dimension_numbers = #tpu.dot_dimension_numbers<[1], [0], [0], [1], [0, 0, 1, 1], [], []>} : vector<16x128xf32>, vector<128x256xf32>, vector<16x256xf32> -> vector<16x256xf32>
    %c0_16 = arith.constant 0 : index
    %c0_17 = arith.constant 0 : index
    %55 = vector.load %arg9[%c0_16, %c0_17] : memref<1x256xf32, #tpu.memory_space<vmem>>, vector<1x256xf32>
    %56 = vector.broadcast %55 : vector<1x256xf32> to vector<16x256xf32>
    %57 = arith.addf %54, %56 : vector<16x256xf32>
    %cst_18 = arith.constant 0.000000e+00 : f32
    %58 = vector.broadcast %cst_18 : f32 to vector<16x256xf32>
    %59 = arith.maximumf %57, %58 : vector<16x256xf32>
    %60 = vector.shape_cast %59 : vector<16x256xf32> to vector<1x16x256xf32>
    %c0_19 = arith.constant 0 : index
    %c0_20 = arith.constant 0 : index
    %61 = vector.load %arg15[%c0_19, %c0_20] : memref<1x256xf32, #tpu.memory_space<vmem>>, vector<1x256xf32>
    %cst_21 = arith.constant dense<0.000000e+00> : vector<1x256xf32>
    %62 = vector.multi_reduction <add>, %60, %cst_21 [1] : vector<1x16x256xf32> to vector<1x256xf32>
    %63 = arith.addf %61, %62 : vector<1x256xf32>
    %c0_22 = arith.constant 0 : index
    %c0_23 = arith.constant 0 : index
    %64 = vector.load %arg15[%c0_22, %c0_23] : memref<1x256xf32, #tpu.memory_space<vmem>>, vector<1x256xf32>
    tpu.vector_store %arg15[%c0_22, %c0_23], %63 {strides = array<i32>} : memref<1x256xf32, #tpu.memory_space<vmem>>, vector<1x256xf32>,
    %c0_i32_24 = arith.constant 0 : i32
    %65 = arith.cmpi eq, %arg1, %c0_i32_24 : i32
    %66 = arith.extui %65 : i1 to i32
    %c0_i32_25 = arith.constant 0 : i32
    %67 = arith.cmpi ne, %66, %c0_i32_25 : i32
    scf.if %67 {
      %c0_26 = arith.constant 0 : index
      %c0_27 = arith.constant 0 : index
      %68 = vector.load %arg15[%c0_26, %c0_27] : memref<1x256xf32, #tpu.memory_space<vmem>>, vector<1x256xf32>
      %cst_28 = arith.constant 6.250000e-02 : f32
      %69 = vector.broadcast %cst_28 : f32 to vector<1x256xf32>
      %70 = arith.mulf %68, %69 : vector<1x256xf32>
      %c0_29 = arith.constant 0 : index
      %c0_30 = arith.constant 0 : index
      %71 = vector.load %arg10[%c0_29, %c0_30] : memref<256x128xf32, #tpu.memory_space<vmem>>, vector<256x128xf32>
      %cst_31 = arith.constant dense<0.000000e+00> : vector<1x128xf32>
      %72 = tpu.matmul %70, %71, %cst_31 {dimension_numbers = #tpu.dot_dimension_numbers<[1], [0], [0], [1], [0, 0, 1, 1], [], []>} : vector<1x256xf32>, vector<256x128xf32>, vector<1x128xf32> -> vector<1x128xf32>
      %c0_32 = arith.constant 0 : index
      %c0_33 = arith.constant 0 : index
      %73 = vector.load %arg11[%c0_32, %c0_33] : memref<1x128xf32, #tpu.memory_space<vmem>>, vector<1x128xf32>
      %74 = arith.addf %72, %73 : vector<1x128xf32>
      %cst_34 = arith.constant 0.000000e+00 : f32
      %75 = vector.broadcast %cst_34 : f32 to vector<1x128xf32>
      %76 = arith.maximumf %74, %75 : vector<1x128xf32>
      %c0_35 = arith.constant 0 : index
      %c0_36 = arith.constant 0 : index
      %77 = vector.load %arg12[%c0_35, %c0_36] : memref<128x1xf32, #tpu.memory_space<vmem>>, vector<128x1xf32>
      %cst_37 = arith.constant dense<0.000000e+00> : vector<1x1xf32>
      %78 = tpu.matmul %76, %77, %cst_37 {dimension_numbers = #tpu.dot_dimension_numbers<[1], [0], [0], [1], [0, 0, 1, 1], [], []>} : vector<1x128xf32>, vector<128x1xf32>, vector<1x1xf32> -> vector<1x1xf32>
      %c0_38 = arith.constant 0 : index
      %c0_39 = arith.constant 0 : index
      %79 = vector.load %arg13[%c0_38, %c0_39] : memref<1x1xf32, #tpu.memory_space<vmem>>, vector<1x1xf32>
      %80 = arith.addf %78, %79 : vector<1x1xf32>
      %81 = vector.shape_cast %80 : vector<1x1xf32> to vector<1x1x1xf32>
      %c0_40 = arith.constant 0 : index
      %c0_41 = arith.constant 0 : index
      %c0_42 = arith.constant 0 : index
      %82 = vector.load %arg14[%c0_40, %c0_41, %c0_42] : memref<1x1x1xf32, #tpu.memory_space<vmem>>, vector<1x1x1xf32>
      tpu.vector_store %arg14[%c0_40, %c0_41, %c0_42], %81 {strides = array<i32>} : memref<1x1x1xf32, #tpu.memory_space<vmem>>, vector<1x1x1xf32>,
    } else {
    }
    return
  }
  func.func @transform_0(%arg0: i32, %arg1: i32) -> (i32, i32, i32) {
    %c0_i32 = arith.constant 0 : i32
    %c0_i32_0 = arith.constant 0 : i32
    return %arg0, %arg1, %c0_i32 : i32, i32, i32
  }
  func.func @transform_1(%arg0: i32, %arg1: i32) -> (i32, i32) {
    %c0_i32 = arith.constant 0 : i32
    %c0_i32_0 = arith.constant 0 : i32
    return %arg1, %c0_i32 : i32, i32
  }
  func.func @transform_2(%arg0: i32, %arg1: i32) -> (i32, i32) {
    %c0_i32 = arith.constant 0 : i32
    %c0_i32_0 = arith.constant 0 : i32
    %c0_i32_1 = arith.constant 0 : i32
    return %c0_i32, %c0_i32_0 : i32, i32
  }
  func.func @transform_3(%arg0: i32, %arg1: i32) -> (i32, i32) {
    %c0_i32 = arith.constant 0 : i32
    %c0_i32_0 = arith.constant 0 : i32
    %c0_i32_1 = arith.constant 0 : i32
    return %c0_i32, %c0_i32_0 : i32, i32
  }
  func.func @transform_4(%arg0: i32, %arg1: i32) -> (i32, i32) {
    %c0_i32 = arith.constant 0 : i32
    %c0_i32_0 = arith.constant 0 : i32
    %c0_i32_1 = arith.constant 0 : i32
    return %c0_i32, %c0_i32_0 : i32, i32
  }
  func.func @transform_5(%arg0: i32, %arg1: i32) -> (i32, i32) {
    %c0_i32 = arith.constant 0 : i32
    %c0_i32_0 = arith.constant 0 : i32
    %c0_i32_1 = arith.constant 0 : i32
    return %c0_i32, %c0_i32_0 : i32, i32
  }
  func.func @transform_6(%arg0: i32, %arg1: i32) -> (i32, i32) {
    %c0_i32 = arith.constant 0 : i32
    %c0_i32_0 = arith.constant 0 : i32
    %c0_i32_1 = arith.constant 0 : i32
    return %c0_i32, %c0_i32_0 : i32, i32
  }
  func.func @transform_7(%arg0: i32, %arg1: i32) -> (i32, i32) {
    %c0_i32 = arith.constant 0 : i32
    %c0_i32_0 = arith.constant 0 : i32
    %c0_i32_1 = arith.constant 0 : i32
    return %c0_i32, %c0_i32_0 : i32, i32
  }
  func.func @transform_8(%arg0: i32, %arg1: i32) -> (i32, i32) {
    %c0_i32 = arith.constant 0 : i32
    %c0_i32_0 = arith.constant 0 : i32
    %c0_i32_1 = arith.constant 0 : i32
    return %c0_i32, %c0_i32_0 : i32, i32
  }
  func.func @transform_9(%arg0: i32, %arg1: i32) -> (i32, i32) {
    %c0_i32 = arith.constant 0 : i32
    %c0_i32_0 = arith.constant 0 : i32
    %c0_i32_1 = arith.constant 0 : i32
    return %c0_i32, %c0_i32_0 : i32, i32
  }
  func.func @transform_10(%arg0: i32, %arg1: i32) -> (i32, i32) {
    %c0_i32 = arith.constant 0 : i32
    %c0_i32_0 = arith.constant 0 : i32
    %c0_i32_1 = arith.constant 0 : i32
    return %c0_i32, %c0_i32_0 : i32, i32
  }
  func.func @transform_11(%arg0: i32, %arg1: i32) -> (i32, i32) {
    %c0_i32 = arith.constant 0 : i32
    %c0_i32_0 = arith.constant 0 : i32
    %c0_i32_1 = arith.constant 0 : i32
    return %c0_i32, %c0_i32_0 : i32, i32
  }
  func.func @transform_12(%arg0: i32, %arg1: i32) -> (i32, i32, i32) {
    %c0_i32 = arith.constant 0 : i32
    %c0_i32_0 = arith.constant 0 : i32
    %c0_i32_1 = arith.constant 0 : i32
    return %arg0, %c0_i32, %c0_i32_0 : i32, i32, i32
  }
}

</mosaic_0001>

<llo_original>
// kernel: tpu_custom_call.1
$region0: #{tpu_custom_call.1}
  #allocation0 [shape = 'u32[]', space=smem, size = 0x4, offset = 0x4, fixed_abs, tag = 'smem constant byte address 0x4 - core index']
  #allocation1 [shape = 'u32[144,128]{1,0:T(1,128)}', space=vmem, size = 0x12000, scoped, tag = 'internal scratch']
  #allocation2 [shape = 'f32[1,256]{1,0:T(1,128)}', space=vmem, size = 0x400, scoped, tag = 'scratch operand']
  #allocation3 [shape = 'f32[1,1]{1,0:T(1,128)S(1)}', space=vmem, size = 0x200, scoped, tag = 'scoped memory for tpu_custom_call.1']
  %s0 = inlined_call_operand.vmem [shape: f32[2,16,6], index: 0, kind: input, shape index: {}]
  %s1 = inlined_call_operand.vmem [shape: f32[16,1], index: 1, kind: input, shape index: {}]
  %s2 = inlined_call_operand.vmem [shape: f32[6,64], index: 2, kind: input, shape index: {}]
  %s3 = inlined_call_operand.vmem [shape: f32[1,64], index: 3, kind: input, shape index: {}]
  %s4 = inlined_call_operand.vmem [shape: f32[64,128], index: 4, kind: input, shape index: {}]
  %s5 = inlined_call_operand.vmem [shape: f32[1,128], index: 5, kind: input, shape index: {}]
  %s6 = inlined_call_operand.hbm [shape: f32[128,256], index: 6, kind: input, shape index: {}]
  %s7 = inlined_call_operand.vmem [shape: f32[1,256], index: 7, kind: input, shape index: {}]
  %s8 = inlined_call_operand.hbm [shape: f32[256,128], index: 8, kind: input, shape index: {}]
  %s9 = inlined_call_operand.vmem [shape: f32[1,128], index: 9, kind: input, shape index: {}]
  %s10 = inlined_call_operand.vmem [shape: f32[128,1], index: 10, kind: input, shape index: {}]
  %s11 = inlined_call_operand.<no memory space> [shape: f32[1,1], index: 11, kind: input, shape index: {}]
  %s12 = inlined_call_operand.vmem [shape: f32[2,1,1], index: 12, kind: output, shape index: {}]
  %s13 = sld [smem:[#allocation0]]
  $region97: #{tpu_custom_call.1} parent=0
    _
  %s15 = ssub.s32 1, %s13
  %s16 = scalar_select 0, %s15, %s13
  %v17 = vstv %s11
  %18 = vst [vmem:[#allocation3] sm:$0x1] %v17
  $region1: #{tpu_custom_call.1} parent=0
    #allocation4 [shape = 'u8[131072]{0}', space=vmem, size = 0x20000, scoped, tag = 'input window, operand 6, single buffered']
    #allocation5 [shape = 's32[2]{0}', space=sflag, size = 0x8, scoped, tag = 'scoped memory for tpu_custom_call.1']
    #allocation6 [shape = 'u8[131072]{0}', space=vmem, size = 0x20000, scoped, tag = 'input window, operand 8, single buffered']
    #allocation7 [shape = 's32[1]{0}', space=sflag, size = 0x4, scoped, tag = 'scoped memory for tpu_custom_call.1']
    %19 = vsyncpa [#allocation5], 0
    %20 = vsyncpa [#allocation7], 0
    loop: start=0, step=1, limit=4
    $region2: #{tpu_custom_call.1} parent=1 // loop_pre_header
      _
    $region3: #{tpu_custom_call.1} parent=1 // loop_header
      %s22 = sphi 0, %s26
      %p23 = scmp.ge.s32.totalorder %s22, 4
      %s29 = sphi 0, %s41
      %s30 = sphi 0, %s37
      %s31 = sphi 0, %s29
      %s32 = sphi 0, %s30
      %s33 = sphi 0, %s31
      %s34 = sphi 0, %s32
      %s46 = sphi 0, %s48
      %s49 = sphi 0, %s46
      %s50 = sphi 0, %s49
      %s66 = sphi 0, %s50
      %s72 = sphi 0, %s74
      %s75 = sphi 0, %s72
      %s76 = sphi 0, %s75
      %s92 = sphi 0, %s76
      %s96 = sphi 0, %s96
      %s98 = sphi 0, %s96
      %s99 = sphi 0, %s98
      %s113 = sphi 0, %s99
      %s117 = sphi 0, %s117
      %s119 = sphi 0, %s117
      %s120 = sphi 0, %s119
      %s134 = sphi 0, %s120
      %s138 = sphi 0, %s138
      %s140 = sphi 0, %s138
      %s141 = sphi 0, %s140
      %s155 = sphi 0, %s141
      %s159 = sphi 0, %s159
      %s161 = sphi 0, %s159
      %s162 = sphi 0, %s161
      %s176 = sphi 0, %s162
      %s180 = sphi 0, %s180
      %s182 = sphi 0, %s180
      %s183 = sphi 0, %s182
      %s197 = sphi 0, %s183
      %s201 = sphi 0, %s201
      %s203 = sphi 0, %s201
      %s204 = sphi 0, %s203
      %s218 = sphi 0, %s204
      %s222 = sphi 0, %s222
      %s224 = sphi 0, %s222
      %s225 = sphi 0, %s224
      %s239 = sphi 0, %s225
      %s243 = sphi 0, %s243
      %s245 = sphi 0, %s243
      %s246 = sphi 0, %s245
      %s260 = sphi 0, %s246
      %s264 = sphi 0, %s264
      %s266 = sphi 0, %s264
      %s267 = sphi 0, %s266
      %s281 = sphi 0, %s267
      %s285 = sphi 0, %s285
      %s287 = sphi 0, %s285
      %s288 = sphi 0, %s287
      %s302 = sphi 0, %s288
      %s308 = sphi 0, %s310
      %s311 = sphi 0, %s308
      %s312 = sphi 0, %s311
      %s328 = sphi 0, %s312
    $region4: #{tpu_custom_call.1} parent=1 // loop_header_branch
      %25 = sbr.rel (%p23) target = $region8
    $region5: #{tpu_custom_call.1} parent=1 // loop_body
      %s27 = ssub.s32 %s22, 1
      %s28 = ssub.s32 %s22, 2
      %s35 = sadd.s32 1, %s30
      %p36 = scmp.ge.s32.totalorder %s35, 1
      %s37 = scalar_select %p36, 0, %s35
      %s38 = sadd.s32 1, %s29
      %s39 = scalar_select %p36, %s38, %s29
      %p40 = scmp.ge.s32.totalorder %s39, 2
      %s41 = scalar_select %p40, 0, %s39
      %s42 = ssub.s32 %s29, %s41
      %s43 = ssub.s32 %s30, %s37
      %s44 = sor.u32 %s42, %s43
      %p45 = scmp.eq.s32.totalorder %s44, 0
      %s47 = sadd.s32 %s46, 1
      %s48 = scalar_select %p45, %s46, %s47
      %p51 = pneg %p45
      %p52 = scmp.eq.s32.totalorder %s22, 1
      %p53 = por %p51, %p52
      %p54 = scmp.ne.s32.totalorder %s46, %s49
      %p55 = scmp.eq.s32.totalorder %s22, 0
      %p56 = por %p54, %p55
      %p57 = scmp.ne.s32.totalorder %s46, %s49
      %p58 = scmp.eq.s32.totalorder %s27, 1
      %p59 = por %p57, %p58
      %p60 = scmp.ne.s32.totalorder %s49, %s50
      %p61 = scmp.eq.s32.totalorder %s27, 0
      %p62 = por %p60, %p61
      %p63 = scmp.ne.s32.totalorder %s49, %s50
      %p64 = scmp.eq.s32.totalorder %s28, 1
      %p65 = por %p63, %p64
      %p67 = scmp.ne.s32.totalorder %s50, %s66
      %p68 = scmp.eq.s32.totalorder %s28, 0
      %p69 = por %p67, %p68
      %s70 = ssub.s32 %s30, %s37
      %p71 = scmp.eq.s32.totalorder %s70, 0
      %s73 = sadd.s32 %s72, 1
      %s74 = scalar_select %p71, %s72, %s73
      %p77 = pneg %p71
      %p78 = scmp.eq.s32.totalorder %s22, 1
      %p79 = por %p77, %p78
      %p80 = scmp.ne.s32.totalorder %s72, %s75
      %p81 = scmp.eq.s32.totalorder %s22, 0
      %p82 = por %p80, %p81
      %p83 = scmp.ne.s32.totalorder %s72, %s75
      %p84 = scmp.eq.s32.totalorder %s27, 1
      %p85 = por %p83, %p84
      %p86 = scmp.ne.s32.totalorder %s75, %s76
      %p87 = scmp.eq.s32.totalorder %s27, 0
      %p88 = por %p86, %p87
      %p89 = scmp.ne.s32.totalorder %s75, %s76
      %p90 = scmp.eq.s32.totalorder %s28, 1
      %p91 = por %p89, %p90
      %p93 = scmp.ne.s32.totalorder %s76, %s92
      %p94 = scmp.eq.s32.totalorder %s28, 0
      %p95 = por %p93, %p94
      %s97 = sadd.s32 %s96, 1
      %p100 = scmp.eq.s32.totalorder %s22, 1
      %p101 = scmp.ne.s32.totalorder %s96, %s98
      %p102 = scmp.eq.s32.totalorder %s22, 0
      %p103 = por %p101, %p102
      %p104 = scmp.ne.s32.totalorder %s96, %s98
      %p105 = scmp.eq.s32.totalorder %s27, 1
      %p106 = por %p104, %p105
      %p107 = scmp.ne.s32.totalorder %s98, %s99
      %p108 = scmp.eq.s32.totalorder %s27, 0
      %p109 = por %p107, %p108
      %p110 = scmp.ne.s32.totalorder %s98, %s99
      %p111 = scmp.eq.s32.totalorder %s28, 1
      %p112 = por %p110, %p111
      %p114 = scmp.ne.s32.totalorder %s99, %s113
      %p115 = scmp.eq.s32.totalorder %s28, 0
      %p116 = por %p114, %p115
      %s118 = sadd.s32 %s117, 1
      %p121 = scmp.eq.s32.totalorder %s22, 1
      %p122 = scmp.ne.s32.totalorder %s117, %s119
      %p123 = scmp.eq.s32.totalorder %s22, 0
      %p124 = por %p122, %p123
      %p125 = scmp.ne.s32.totalorder %s117, %s119
      %p126 = scmp.eq.s32.totalorder %s27, 1
      %p127 = por %p125, %p126
      %p128 = scmp.ne.s32.totalorder %s119, %s120
      %p129 = scmp.eq.s32.totalorder %s27, 0
      %p130 = por %p128, %p129
      %p131 = scmp.ne.s32.totalorder %s119, %s120
      %p132 = scmp.eq.s32.totalorder %s28, 1
      %p133 = por %p131, %p132
      %p135 = scmp.ne.s32.totalorder %s120, %s134
      %p136 = scmp.eq.s32.totalorder %s28, 0
      %p137 = por %p135, %p136
      %s139 = sadd.s32 %s138, 1
      %p142 = scmp.eq.s32.totalorder %s22, 1
      %p143 = scmp.ne.s32.totalorder %s138, %s140
      %p144 = scmp.eq.s32.totalorder %s22, 0
      %p145 = por %p143, %p144
      %p146 = scmp.ne.s32.totalorder %s138, %s140
      %p147 = scmp.eq.s32.totalorder %s27, 1
      %p148 = por %p146, %p147
      %p149 = scmp.ne.s32.totalorder %s140, %s141
      %p150 = scmp.eq.s32.totalorder %s27, 0
      %p151 = por %p149, %p150
      %p152 = scmp.ne.s32.totalorder %s140, %s141
      %p153 = scmp.eq.s32.totalorder %s28, 1
      %p154 = por %p152, %p153
      %p156 = scmp.ne.s32.totalorder %s141, %s155
      %p157 = scmp.eq.s32.totalorder %s28, 0
      %p158 = por %p156, %p157
      %s160 = sadd.s32 %s159, 1
      %p163 = scmp.eq.s32.totalorder %s22, 1
      %p164 = scmp.ne.s32.totalorder %s159, %s161
      %p165 = scmp.eq.s32.totalorder %s22, 0
      %p166 = por %p164, %p165
      %p167 = scmp.ne.s32.totalorder %s159, %s161
      %p168 = scmp.eq.s32.totalorder %s27, 1
      %p169 = por %p167, %p168
      %p170 = scmp.ne.s32.totalorder %s161, %s162
      %p171 = scmp.eq.s32.totalorder %s27, 0
      %p172 = por %p170, %p171
      %p173 = scmp.ne.s32.totalorder %s161, %s162
      %p174 = scmp.eq.s32.totalorder %s28, 1
      %p175 = por %p173, %p174
      %p177 = scmp.ne.s32.totalorder %s162, %s176
      %p178 = scmp.eq.s32.totalorder %s28, 0
      %p179 = por %p177, %p178
      %s181 = sadd.s32 %s180, 1
      %p184 = scmp.eq.s32.totalorder %s22, 1
      %p185 = scmp.ne.s32.totalorder %s180, %s182
      %p186 = scmp.eq.s32.totalorder %s22, 0
      %p187 = por %p185, %p186
      %p188 = scmp.ne.s32.totalorder %s180, %s182
      %p189 = scmp.eq.s32.totalorder %s27, 1
      %p190 = por %p188, %p189
      %p191 = scmp.ne.s32.totalorder %s182, %s183
      %p192 = scmp.eq.s32.totalorder %s27, 0
      %p193 = por %p191, %p192
      %p194 = scmp.ne.s32.totalorder %s182, %s183
      %p195 = scmp.eq.s32.totalorder %s28, 1
      %p196 = por %p194, %p195
      %p198 = scmp.ne.s32.totalorder %s183, %s197
      %p199 = scmp.eq.s32.totalorder %s28, 0
      %p200 = por %p198, %p199
      %s202 = sadd.s32 %s201, 1
      %p205 = scmp.eq.s32.totalorder %s22, 1
      %p206 = scmp.ne.s32.totalorder %s201, %s203
      %p207 = scmp.eq.s32.totalorder %s22, 0
      %p208 = por %p206, %p207
      %p209 = scmp.ne.s32.totalorder %s201, %s203
      %p210 = scmp.eq.s32.totalorder %s27, 1
      %p211 = por %p209, %p210
      %p212 = scmp.ne.s32.totalorder %s203, %s204
      %p213 = scmp.eq.s32.totalorder %s27, 0
      %p214 = por %p212, %p213
      %p215 = scmp.ne.s32.totalorder %s203, %s204
      %p216 = scmp.eq.s32.totalorder %s28, 1
      %p217 = por %p215, %p216
      %p219 = scmp.ne.s32.totalorder %s204, %s218
      %p220 = scmp.eq.s32.totalorder %s28, 0
      %p221 = por %p219, %p220
      %s223 = sadd.s32 %s222, 1
      %p226 = scmp.eq.s32.totalorder %s22, 1
      %p227 = scmp.ne.s32.totalorder %s222, %s224
      %p228 = scmp.eq.s32.totalorder %s22, 0
      %p229 = por %p227, %p228
      %p230 = scmp.ne.s32.totalorder %s222, %s224
      %p231 = scmp.eq.s32.totalorder %s27, 1
      %p232 = por %p230, %p231
      %p233 = scmp.ne.s32.totalorder %s224, %s225
      %p234 = scmp.eq.s32.totalorder %s27, 0
      %p235 = por %p233, %p234
      %p236 = scmp.ne.s32.totalorder %s224, %s225
      %p237 = scmp.eq.s32.totalorder %s28, 1
      %p238 = por %p236, %p237
      %p240 = scmp.ne.s32.totalorder %s225, %s239
      %p241 = scmp.eq.s32.totalorder %s28, 0
      %p242 = por %p240, %p241
      %s244 = sadd.s32 %s243, 1
      %p247 = scmp.eq.s32.totalorder %s22, 1
      %p248 = scmp.ne.s32.totalorder %s243, %s245
      %p249 = scmp.eq.s32.totalorder %s22, 0
      %p250 = por %p248, %p249
      %p251 = scmp.ne.s32.totalorder %s243, %s245
      %p252 = scmp.eq.s32.totalorder %s27, 1
      %p253 = por %p251, %p252
      %p254 = scmp.ne.s32.totalorder %s245, %s246
      %p255 = scmp.eq.s32.totalorder %s27, 0
      %p256 = por %p254, %p255
      %p257 = scmp.ne.s32.totalorder %s245, %s246
      %p258 = scmp.eq.s32.totalorder %s28, 1
      %p259 = por %p257, %p258
      %p261 = scmp.ne.s32.totalorder %s246, %s260
      %p262 = scmp.eq.s32.totalorder %s28, 0
      %p263 = por %p261, %p262
      %s265 = sadd.s32 %s264, 1
      %p268 = scmp.eq.s32.totalorder %s22, 1
      %p269 = scmp.ne.s32.totalorder %s264, %s266
      %p270 = scmp.eq.s32.totalorder %s22, 0
      %p271 = por %p269, %p270
      %p272 = scmp.ne.s32.totalorder %s264, %s266
      %p273 = scmp.eq.s32.totalorder %s27, 1
      %p274 = por %p272, %p273
      %p275 = scmp.ne.s32.totalorder %s266, %s267
      %p276 = scmp.eq.s32.totalorder %s27, 0
      %p277 = por %p275, %p276
      %p278 = scmp.ne.s32.totalorder %s266, %s267
      %p279 = scmp.eq.s32.totalorder %s28, 1
      %p280 = por %p278, %p279
      %p282 = scmp.ne.s32.totalorder %s267, %s281
      %p283 = scmp.eq.s32.totalorder %s28, 0
      %p284 = por %p282, %p283
      %s286 = sadd.s32 %s285, 1
      %p289 = scmp.eq.s32.totalorder %s22, 1
      %p290 = scmp.ne.s32.totalorder %s285, %s287
      %p291 = scmp.eq.s32.totalorder %s22, 0
      %p292 = por %p290, %p291
      %p293 = scmp.ne.s32.totalorder %s285, %s287
      %p294 = scmp.eq.s32.totalorder %s27, 1
      %p295 = por %p293, %p294
      %p296 = scmp.ne.s32.totalorder %s287, %s288
      %p297 = scmp.eq.s32.totalorder %s27, 0
      %p298 = por %p296, %p297
      %p299 = scmp.ne.s32.totalorder %s287, %s288
      %p300 = scmp.eq.s32.totalorder %s28, 1
      %p301 = por %p299, %p300
      %p303 = scmp.ne.s32.totalorder %s288, %s302
      %p304 = scmp.eq.s32.totalorder %s28, 0
      %p305 = por %p303, %p304
      %s306 = ssub.s32 %s29, %s41
      %p307 = scmp.eq.s32.totalorder %s306, 0
      %s309 = sadd.s32 %s308, 1
      %s310 = scalar_select %p307, %s308, %s309
      %p313 = pneg %p307
      %p314 = scmp.eq.s32.totalorder %s22, 1
      %p315 = por %p313, %p314
      %p316 = scmp.ne.s32.totalorder %s308, %s311
      %p317 = scmp.eq.s32.totalorder %s22, 0
      %p318 = por %p316, %p317
      %p319 = scmp.ne.s32.totalorder %s308, %s311
      %p320 = scmp.eq.s32.totalorder %s27, 1
      %p321 = por %p319, %p320
      %p322 = scmp.ne.s32.totalorder %s311, %s312
      %p323 = scmp.eq.s32.totalorder %s27, 0
      %p324 = por %p322, %p323
      %p325 = scmp.ne.s32.totalorder %s311, %s312
      %p326 = scmp.eq.s32.totalorder %s28, 1
      %p327 = por %p325, %p326
      %p329 = scmp.ne.s32.totalorder %s312, %s328
      %p330 = scmp.eq.s32.totalorder %s28, 0
      %p331 = por %p329, %p330
      %p332 = scmp.le.s32.totalorder 1, %s22
      %p333 = scmp.lt.s32.totalorder %s22, 3
      %p334 = pnand %p332, %p333
      %p335 = pneg %p334
      // Predicated region
      $region9: #{tpu_custom_call.1} parent=5 // pred_check
        _
      $region10: #{tpu_custom_call.1} parent=5 // pred_check_branch
        %337 = sbr.rel (%p334) target = $region12
      $region11: #{tpu_custom_call.1} parent=5 // pred_region
        %s338 = ssub.s32 %s22, 1
        // Predicated region
        $region13: #{tpu_custom_call.1} parent=11 // pred_check
          %p339 = pneg %p88
        $region14: #{tpu_custom_call.1} parent=11 // pred_check_branch
          %341 = sbr.rel (%p339) target = $region16
        $region15: #{tpu_custom_call.1} parent=11 // pred_region
          %s342 = smul.u32 2, %s32
          %p343 = scmp.lt.s32.totalorder %s342, 1
          %s344 = scalar_select %p343, %s342, 1
          %s345 = smul.addr %s344, 8
          %s346 = scalar_lea.vmem %s1, %s345
          %s347 = smul.u32 2, %s32
        $region16: #{tpu_custom_call.1} parent=11 // pred_fallthru
          _
        // Predicated region
        $region17: #{tpu_custom_call.1} parent=11 // pred_check
          %p348 = pneg %p109
        $region18: #{tpu_custom_call.1} parent=11 // pred_check_branch
          %350 = sbr.rel (%p348) target = $region20
        $region19: #{tpu_custom_call.1} parent=11 // pred_region
          _
        $region20: #{tpu_custom_call.1} parent=11 // pred_fallthru
          _
        // Predicated region
        $region21: #{tpu_custom_call.1} parent=11 // pred_check
          %p351 = pneg %p130
        $region22: #{tpu_custom_call.1} parent=11 // pred_check_branch
          %353 = sbr.rel (%p351) target = $region24
        $region23: #{tpu_custom_call.1} parent=11 // pred_region
          _
        $region24: #{tpu_custom_call.1} parent=11 // pred_fallthru
          _
        // Predicated region
        $region25: #{tpu_custom_call.1} parent=11 // pred_check
          %p354 = pneg %p151
        $region26: #{tpu_custom_call.1} parent=11 // pred_check_branch
          %356 = sbr.rel (%p354) target = $region28
        $region27: #{tpu_custom_call.1} parent=11 // pred_region
          _
        $region28: #{tpu_custom_call.1} parent=11 // pred_fallthru
          _
        // Predicated region
        $region29: #{tpu_custom_call.1} parent=11 // pred_check
          %p357 = pneg %p172
        $region30: #{tpu_custom_call.1} parent=11 // pred_check_branch
          %359 = sbr.rel (%p357) target = $region32
        $region31: #{tpu_custom_call.1} parent=11 // pred_region
          _
        $region32: #{tpu_custom_call.1} parent=11 // pred_fallthru
          _
        // Predicated region
        $region33: #{tpu_custom_call.1} parent=11 // pred_check
          %p360 = pneg %p193
        $region34: #{tpu_custom_call.1} parent=11 // pred_check_branch
          %362 = sbr.rel (%p360) target = $region36
        $region35: #{tpu_custom_call.1} parent=11 // pred_region
          %s364 = ssub.s32 4096, 4096
          %365 = vsyncadd [#allocation5], %s364
          %s366 = sshll.u32 [#allocation4], 4
          %s367 = int_to_ptr.vmem [resolvable:$true] %s366
          %372 = dma.hbm_to_vmem [thread:$0]  %s6, 4096, %s367, [#allocation5], 256, 256, 16
        $region36: #{tpu_custom_call.1} parent=11 // pred_fallthru
          _
        // Predicated region
        $region37: #{tpu_custom_call.1} parent=11 // pred_check
          %p373 = pneg %p214
        $region38: #{tpu_custom_call.1} parent=11 // pred_check_branch
          %375 = sbr.rel (%p373) target = $region40
        $region39: #{tpu_custom_call.1} parent=11 // pred_region
          _
        $region40: #{tpu_custom_call.1} parent=11 // pred_fallthru
          _
        // Predicated region
        $region41: #{tpu_custom_call.1} parent=11 // pred_check
          %p376 = pneg %p235
        $region42: #{tpu_custom_call.1} parent=11 // pred_check_branch
          %378 = sbr.rel (%p376) target = $region44
        $region43: #{tpu_custom_call.1} parent=11 // pred_region
          %s380 = ssub.s32 4096, 4096
          %381 = vsyncadd [#allocation7], %s380
          %s382 = sshll.u32 [#allocation6], 4
          %s383 = int_to_ptr.vmem [resolvable:$true] %s382
          %388 = dma.hbm_to_vmem [thread:$0]  %s8, 4096, %s383, [#allocation7], 128, 128, 8
        $region44: #{tpu_custom_call.1} parent=11 // pred_fallthru
          _
        // Predicated region
        $region45: #{tpu_custom_call.1} parent=11 // pred_check
          %p389 = pneg %p256
        $region46: #{tpu_custom_call.1} parent=11 // pred_check_branch
          %391 = sbr.rel (%p389) target = $region48
        $region47: #{tpu_custom_call.1} parent=11 // pred_region
          _
        $region48: #{tpu_custom_call.1} parent=11 // pred_fallthru
          _
        // Predicated region
        $region49: #{tpu_custom_call.1} parent=11 // pred_check
          %p392 = pneg %p277
        $region50: #{tpu_custom_call.1} parent=11 // pred_check_branch
          %394 = sbr.rel (%p392) target = $region52
        $region51: #{tpu_custom_call.1} parent=11 // pred_region
          _
        $region52: #{tpu_custom_call.1} parent=11 // pred_fallthru
          _
        // Predicated region
        $region53: #{tpu_custom_call.1} parent=11 // pred_check
          %p395 = pneg %p298
        $region54: #{tpu_custom_call.1} parent=11 // pred_check_branch
          %397 = sbr.rel (%p395) target = $region56
        $region55: #{tpu_custom_call.1} parent=11 // pred_region
          _
        $region56: #{tpu_custom_call.1} parent=11 // pred_fallthru
          _
      $region12: #{tpu_custom_call.1} parent=5 // pred_fallthru
        _
      %p398 = scmp.lt.s32.totalorder %s22, 2
      // Predicated region
      $region57: #{tpu_custom_call.1} parent=5 // pred_check
        %p399 = pneg %p398
      $region58: #{tpu_custom_call.1} parent=5 // pred_check_branch
        %401 = sbr.rel (%p399) target = $region60
      $region59: #{tpu_custom_call.1} parent=5 // pred_region
        // Predicated region
        $region61: #{tpu_custom_call.1} parent=59 // pred_check
          %p402 = pneg %p56
        $region62: #{tpu_custom_call.1} parent=59 // pred_check_branch
          %404 = sbr.rel (%p402) target = $region64
        $region63: #{tpu_custom_call.1} parent=59 // pred_region
          %s405 = smul.u32 2, %s30
          %p406 = scmp.lt.s32.totalorder %s29, 1
          %s407 = scalar_select %p406, %s29, 1
          %p408 = scmp.lt.s32.totalorder %s405, 1
          %s409 = scalar_select %p408, %s405, 1
          %s410 = smul.addr %s407, 2
          %s411 = sadd.s32 %s409, %s410
          %s412 = smul.addr %s411, 8
          %s413 = scalar_lea.vmem %s0, %s412
          %s414 = smul.u32 2, %s30
        $region64: #{tpu_custom_call.1} parent=59 // pred_fallthru
          _
      $region60: #{tpu_custom_call.1} parent=5 // pred_fallthru
        _
      %p415 = scmp.le.s32.totalorder 1, %s22
      %p416 = scmp.lt.s32.totalorder %s22, 3
      %p417 = pnand %p415, %p416
      %p418 = pneg %p417
      // Predicated region
      $region65: #{tpu_custom_call.1} parent=5 // pred_check
        _
      $region66: #{tpu_custom_call.1} parent=5 // pred_check_branch
        %420 = sbr.rel (%p417) target = $region68
      $region67: #{tpu_custom_call.1} parent=5 // pred_region
        %s421 = ssub.s32 %s22, 1
        // Predicated region
        $region69: #{tpu_custom_call.1} parent=67 // pred_check
          %p422 = pneg %p193
        $region70: #{tpu_custom_call.1} parent=67 // pred_check_branch
          %424 = sbr.rel (%p422) target = $region72
        $region71: #{tpu_custom_call.1} parent=67 // pred_region
          %425 = dma.done [#allocation5], 4096
        $region72: #{tpu_custom_call.1} parent=67 // pred_fallthru
          _
        // Predicated region
        $region73: #{tpu_custom_call.1} parent=67 // pred_check
          %p426 = pneg %p235
        $region74: #{tpu_custom_call.1} parent=67 // pred_check_branch
          %428 = sbr.rel (%p426) target = $region76
        $region75: #{tpu_custom_call.1} parent=67 // pred_region
          %429 = dma.done [#allocation7], 4096
        $region76: #{tpu_custom_call.1} parent=67 // pred_fallthru
          _
        %s430 = smul.u32 2, %s32
        %p431 = scmp.lt.s32.totalorder %s31, 1
        %s432 = scalar_select %p431, %s31, 1
        %p433 = scmp.lt.s32.totalorder %s430, 1
        %s434 = scalar_select %p433, %s430, 1
        %s435 = smul.addr %s432, 2
        %s436 = sadd.s32 %s434, %s435
        %s437 = smul.addr %s436, 8
        %s438 = scalar_lea.vmem %s0, %s437
        %p439 = pneg %p62
        %p440 = pneg %p59
        %s441 = smul.u32 2, %s32
        %p442 = scmp.lt.s32.totalorder %s441, 1
        %s443 = scalar_select %p442, %s441, 1
        %s444 = smul.addr %s443, 8
        %s445 = scalar_lea.vmem %s1, %s444
        %p446 = pneg %p88
        %p447 = pneg %p85
        %p448 = pneg %p109
        %p449 = pneg %p106
        %p450 = pneg %p130
        %p451 = pneg %p127
        %p452 = pneg %p151
        %p453 = pneg %p148
        %p454 = pneg %p172
        %p455 = pneg %p169
        %p456 = pneg %p193
        %p457 = pneg %p190
        %p458 = pneg %p214
        %p459 = pneg %p211
        %p460 = pneg %p235
        %p461 = pneg %p232
        %p462 = pneg %p256
        %p463 = pneg %p253
        %p464 = pneg %p277
        %p465 = pneg %p274
        %p466 = pneg %p298
        %p467 = pneg %p295
        %p468 = pneg %p324
        %p469 = pneg %p321
        %p470 = scmp.lt.s32.totalorder %s31, 1
        %s471 = scalar_select %p470, %s31, 1
        %s472 = scalar_lea.vmem %s12, %s471
        %s473 = smul.u32 2, %s32
        %p474 = scmp.lt.s32.totalorder %s31, 1
        %s475 = scalar_select %p474, %s31, 1
        %p476 = scmp.lt.s32.totalorder %s473, 1
        %s477 = scalar_select %p476, %s473, 1
        %s478 = smul.addr %s475, 2
        %s479 = sadd.s32 %s477, %s478
        %s480 = smul.addr %s479, 8
        %s481 = scalar_lea.vmem %s0, %s480
        %s482 = smul.u32 2, %s32
        %s483 = smul.u32 2, %s32
        %p484 = scmp.lt.s32.totalorder %s483, 1
        %s485 = scalar_select %p484, %s483, 1
        %s486 = smul.addr %s485, 8
        %s487 = scalar_lea.vmem %s1, %s486
        %s488 = smul.u32 2, %s32
        %p489 = scmp.lt.s32.totalorder %s31, 1
        %s490 = scalar_select %p489, %s31, 1
        %s491 = scalar_lea.vmem %s12, %s490
        %p492 = scmp.eq.s32.totalorder %s32, 0
        // Predicated region
        $region77: #{tpu_custom_call.1} parent=67 // pred_check
          %p493 = pneg %p492
        $region78: #{tpu_custom_call.1} parent=67 // pred_check_branch
          %495 = sbr.rel (%p493) target = $region80
        $region79: #{tpu_custom_call.1} parent=67 // pred_region
          %v496 = vlaneseq
          %vm497 = vcmp.ge.s32.totalorder %v496, 0
          %vm498 = vcmp.lt.s32.totalorder %v496, 256
          %vm499 = vmand %vm497, %vm498
          %500 = vst.msk [vmem:[#allocation2] sm:$0x3] %vm499, 0.0
        $region80: #{tpu_custom_call.1} parent=67 // pred_fallthru
          _
        %v501 = vld [vmem:[%s481] sm:$0xff]
        %v502 = vld [vmem:[%s481 + $0x8] sm:$0xff]
        %v503 = vld [vmem:[%s2] sm:$0x3f]
        %505 = vset.pattern.permute.xlu0 0
        %506 = vperm.xlu0 %505, %v501
        %v507 = vpop.permute.xlu0 %506
        %510 = vset.pattern.permute.xlu0 0
        %511 = vperm.xlu0 %510, %v502
        %v512 = vpop.permute.xlu0 %511
        %v514 = vlaneseq
        %v515 = vshrl.u32 %v514, 7
        %v516 = vsub.s32 0, %v515
        %v517 = vrot.slane %v503, %v516
        %v518 = vmul.f32 %v507, %v517
        %v519 = vmul.f32 %v512, %v517
        %520 = vset.pattern.permute.xlu0 1
        %521 = vperm.xlu0 %520, %v501
        %v522 = vpop.permute.xlu0 %521
        %524 = vset.pattern.permute.xlu0 1
        %525 = vperm.xlu0 %524, %v502
        %v526 = vpop.permute.xlu0 %525
        %v528 = vlaneseq
        %v529 = vshrl.u32 %v528, 7
        %v530 = vsub.s32 1, %v529
        %v531 = vrot.slane %v503, %v530
        %v532 = vmul.f32 %v522, %v531
        %v533 = vmul.f32 %v526, %v531
        %v534 = vadd.f32 %v518, %v532
        %v535 = vadd.f32 %v519, %v533
        %536 = vset.pattern.permute.xlu0 2
        %537 = vperm.xlu0 %536, %v501
        %v538 = vpop.permute.xlu0 %537
        %540 = vset.pattern.permute.xlu0 2
        %541 = vperm.xlu0 %540, %v502
        %v542 = vpop.permute.xlu0 %541
        %v544 = vlaneseq
        %v545 = vshrl.u32 %v544, 7
        %v546 = vsub.s32 2, %v545
        %v547 = vrot.slane %v503, %v546
        %v548 = vmul.f32 %v538, %v547
        %v549 = vmul.f32 %v542, %v547
        %v550 = vadd.f32 %v534, %v548
        %v551 = vadd.f32 %v535, %v549
        %552 = vset.pattern.permute.xlu0 3
        %553 = vperm.xlu0 %552, %v501
        %v554 = vpop.permute.xlu0 %553
        %556 = vset.pattern.permute.xlu0 3
        %557 = vperm.xlu0 %556, %v502
        %v558 = vpop.permute.xlu0 %557
        %v560 = vlaneseq
        %v561 = vshrl.u32 %v560, 7
        %v562 = vsub.s32 3, %v561
        %v563 = vrot.slane %v503, %v562
        %v564 = vmul.f32 %v554, %v563
        %v565 = vmul.f32 %v558, %v563
        %v566 = vadd.f32 %v550, %v564
        %v567 = vadd.f32 %v551, %v565
        %568 = vset.pattern.permute.xlu0 4
        %569 = vperm.xlu0 %568, %v501
        %v570 = vpop.permute.xlu0 %569
        %572 = vset.pattern.permute.xlu0 4
        %573 = vperm.xlu0 %572, %v502
        %v574 = vpop.permute.xlu0 %573
        %v576 = vlaneseq
        %v577 = vshrl.u32 %v576, 7
        %v578 = vsub.s32 4, %v577
        %v579 = vrot.slane %v503, %v578
        %v580 = vmul.f32 %v570, %v579
        %v581 = vmul.f32 %v574, %v579
        %v582 = vadd.f32 %v566, %v580
        %v583 = vadd.f32 %v567, %v581
        %584 = vset.pattern.permute.xlu0 5
        %585 = vperm.xlu0 %584, %v501
        %v586 = vpop.permute.xlu0 %585
        %588 = vset.pattern.permute.xlu0 5
        %589 = vperm.xlu0 %588, %v502
        %v590 = vpop.permute.xlu0 %589
        %v592 = vlaneseq
        %v593 = vshrl.u32 %v592, 7
        %v594 = vsub.s32 5, %v593
        %v595 = vrot.slane %v503, %v594
        %v596 = vmul.f32 %v586, %v595
        %v597 = vmul.f32 %v590, %v595
        %v598 = vadd.f32 %v582, %v596
        %v599 = vadd.f32 %v583, %v597
        %v600 = vld [vmem:[%s3] sm:$0x1]
        %v602 = vlaneseq
        %v603 = vshrl.u32 %v602, 7
        %v604 = vsub.s32 0, %v603
        %v605 = vrot.slane %v600, %v604
        %v607 = vadd.f32 %v598, %v605
        %v608 = vadd.f32 %v599, %v605
        %v609 = vmax.f32 %v607, 0.0
        %v610 = vmax.f32 %v608, 0.0
        %v611 = vld [vmem:[%s4] sm:$0xff]
        %v612 = vld [vmem:[%s4 + $0x8] sm:$0xff]
        %v613 = vld [vmem:[%s4 + $0x10] sm:$0xff]
        %v614 = vld [vmem:[%s4 + $0x18] sm:$0xff]
        %v615 = vld [vmem:[%s4 + $0x20] sm:$0xff]
        %v616 = vld [vmem:[%s4 + $0x28] sm:$0xff]
        %v617 = vld [vmem:[%s4 + $0x30] sm:$0xff]
        %v618 = vld [vmem:[%s4 + $0x38] sm:$0xff]
        %v619 = vld [vmem:[%s5] sm:$0x1]
        %v621 = vlaneseq
        %v622 = vshrl.u32 %v621, 7
        %v623 = vsub.s32 0, %v622
        %v624 = vrot.slane %v619, %v623
        %vm626 = vcmask 523264
        %v628 = vsel %vm626, %v609, 0
        %v631 = vsel %vm626, %v610, 0
        %633 = vmatprep.subr.mxu0 0.0
        %634 = vmatpush1.msra.mxu0 %v611
        %635 = vmatprep.subr.mxu0 0.0
        %636 = vmatpush1.msra.mxu0 %v612
        %637 = vmatprep.subr.mxu0 0.0
        %638 = vmatpush1.msra.mxu0 %v613
        %639 = vmatprep.subr.mxu0 0.0
        %640 = vmatpush1.msra.mxu0 %v614
        %641 = vmatprep.subr.mxu0 0.0
        %642 = vmatpush1.msra.mxu0 %v615
        %643 = vmatprep.subr.mxu0 0.0
        %644 = vmatpush1.msra.mxu0 %v616
        %645 = vmatprep.subr.mxu0 0.0
        %646 = vmatpush1.msra.mxu0 %v617
        %647 = vmatprep.subr.mxu0 0.0
        %648 = vmatpush1.msra.mxu0 %v618
        %649 = vmatprep.subr.mxu0 0.0
        %650 = vmatpush1.msra.mxu0 0.0
        %651 = vmatprep.subr.mxu0 0.0
        %652 = vmatpush1.msra.mxu0 0.0
        %653 = vmatprep.subr.mxu0 0.0
        %654 = vmatpush1.msra.mxu0 0.0
        %655 = vmatprep.subr.mxu0 0.0
        %656 = vmatpush1.msra.mxu0 0.0
        %657 = vmatprep.subr.mxu0 0.0
        %658 = vmatpush1.msra.mxu0 0.0
        %659 = vmatprep.subr.mxu0 0.0
        %660 = vmatpush1.msra.mxu0 0.0
        %661 = vmatprep.subr.mxu0 0.0
        %662 = vmatpush1.msra.mxu0 0.0
        %663 = vmatprep.subr.mxu0 0.0
        %664 = vmatpush1.msra.mxu0 0.0
        %665 = vmatprep.subr.mxu0 0.0
        %666 = vmatpush1.msra.mxu0 0.0
        %667 = vmatprep.subr.mxu0 0.0
        %668 = vmatpush1.msra.mxu0 0.0
        %669 = vmatprep.subr.mxu0 0.0
        %670 = vmatpush1.msra.mxu0 0.0
        %671 = vmatprep.subr.mxu0 0.0
        %672 = vmatpush1.msra.mxu0 0.0
        %673 = vmatprep.subr.mxu0 0.0
        %674 = vmatpush1.msra.mxu0 0.0
        %675 = vmatprep.subr.mxu0 0.0
        %676 = vmatpush1.msra.mxu0 0.0
        %677 = vmatprep.subr.mxu0 0.0
        %678 = vmatpush1.msra.mxu0 0.0
        %679 = vmatprep.subr.mxu0 0.0
        %680 = vmatpush1.msra.mxu0 0.0
        %681 = vmatprep.subr.mxu0 0.0
        %682 = vmatpush1.msra.mxu0 0.0
        %683 = vmatprep.subr.mxu0 0.0
        %684 = vmatpush1.msra.mxu0 0.0
        %685 = vmatprep.subr.mxu0 0.0
        %686 = vmatpush1.msra.mxu0 0.0
        %687 = vmatprep.subr.mxu0 0.0
        %688 = vmatpush1.msra.mxu0 0.0
        %689 = vmatprep.subr.mxu0 0.0
        %690 = vmatpush1.msra.mxu0 0.0
        %691 = vmatprep.subr.mxu0 0.0
        %692 = vmatpush1.msra.mxu0 0.0
        %693 = vmatprep.subr.mxu0 0.0
        %694 = vmatpush1.msra.mxu0 0.0
        %695 = vmatprep.subr.mxu0 0.0
        %696 = vmatpush1.msra.mxu0 0.0
        %697 = vmatprep.mubr.f32.mxu0 0.0
        %698 = vmatmul.mubr.f32.gmra.mrb[0].mxu0 %v628
        %v699 = vpop.f32.mrb[0].mxu0
        %v700 = vadd.f32 %v624, %v699
        %v701 = vpop.f32.mrb[0].mxu0
        %702 = vmatprep.mubr.f32.mxu0 0.0
        %703 = vmatmul.mubr.f32.gmra.mrb[0].mxu0 %v631
        %v704 = vpop.f32.mrb[0].mxu0
        %v705 = vadd.f32 %v624, %v704
        %v706 = vpop.f32.mrb[0].mxu0
        %707 = vdwg.mxu0
        %v708 = vmax.f32 %v700, 0.0
        %v709 = vmax.f32 %v705, 0.0
        %v710 = vld [vmem:[#allocation4] sm:$0xff]
        %v711 = vld [vmem:[#allocation4 + $0x8] sm:$0xff]
        %v712 = vld [vmem:[#allocation4 + $0x10] sm:$0xff]
        %v713 = vld [vmem:[#allocation4 + $0x18] sm:$0xff]
        %v714 = vld [vmem:[#allocation4 + $0x20] sm:$0xff]
        %v715 = vld [vmem:[#allocation4 + $0x28] sm:$0xff]
        %v716 = vld [vmem:[#allocation4 + $0x30] sm:$0xff]
        %v717 = vld [vmem:[#allocation4 + $0x38] sm:$0xff]
        %v718 = vld [vmem:[#allocation4 + $0x40] sm:$0xff]
        %v719 = vld [vmem:[#allocation4 + $0x48] sm:$0xff]
        %v720 = vld [vmem:[#allocation4 + $0x50] sm:$0xff]
        %v721 = vld [vmem:[#allocation4 + $0x58] sm:$0xff]
        %v722 = vld [vmem:[#allocation4 + $0x60] sm:$0xff]
        %v723 = vld [vmem:[#allocation4 + $0x68] sm:$0xff]
        %v724 = vld [vmem:[#allocation4 + $0x70] sm:$0xff]
        %v725 = vld [vmem:[#allocation4 + $0x78] sm:$0xff]
        %v726 = vld [vmem:[#allocation4 + $0x80] sm:$0xff]
        %v727 = vld [vmem:[#allocation4 + $0x88] sm:$0xff]
        %v728 = vld [vmem:[#allocation4 + $0x90] sm:$0xff]
        %v729 = vld [vmem:[#allocation4 + $0x98] sm:$0xff]
        %v730 = vld [vmem:[#allocation4 + $0xa0] sm:$0xff]
        %v731 = vld [vmem:[#allocation4 + $0xa8] sm:$0xff]
        %v732 = vld [vmem:[#allocation4 + $0xb0] sm:$0xff]
        %v733 = vld [vmem:[#allocation4 + $0xb8] sm:$0xff]
        %v734 = vld [vmem:[#allocation4 + $0xc0] sm:$0xff]
        %v735 = vld [vmem:[#allocation4 + $0xc8] sm:$0xff]
        %v736 = vld [vmem:[#allocation4 + $0xd0] sm:$0xff]
        %v737 = vld [vmem:[#allocation4 + $0xd8] sm:$0xff]
        %v738 = vld [vmem:[#allocation4 + $0xe0] sm:$0xff]
        %v739 = vld [vmem:[#allocation4 + $0xe8] sm:$0xff]
        %v740 = vld [vmem:[#allocation4 + $0xf0] sm:$0xff]
        %v741 = vld [vmem:[#allocation4 + $0xf8] sm:$0xff]
        %v742 = vld [vmem:[%s7] sm:$0x3]
        %v744 = vlaneseq
        %v745 = vshrl.u32 %v744, 7
        %v746 = vsub.s32 0, %v745
        %v747 = vrot.slane %v742, %v746
        %v748 = vlaneseq
        %v749 = vshrl.u32 %v748, 7
        %v750 = vsub.s32 1, %v749
        %v751 = vrot.slane %v742, %v750
        %754 = vmatprep.subr.mxu0 %v711
        %755 = vmatpush1.msra.mxu0 %v710
        %756 = vmatprep.subr.mxu0 %v713
        %757 = vmatpush1.msra.mxu0 %v712
        %758 = vmatprep.subr.mxu0 %v715
        %759 = vmatpush1.msra.mxu0 %v714
        %760 = vmatprep.subr.mxu0 %v717
        %761 = vmatpush1.msra.mxu0 %v716
        %762 = vmatprep.subr.mxu0 %v719
        %763 = vmatpush1.msra.mxu0 %v718
        %764 = vmatprep.subr.mxu0 %v721
        %765 = vmatpush1.msra.mxu0 %v720
        %766 = vmatprep.subr.mxu0 %v723
        %767 = vmatpush1.msra.mxu0 %v722
        %768 = vmatprep.subr.mxu0 %v725
        %769 = vmatpush1.msra.mxu0 %v724
        %770 = vmatprep.subr.mxu0 %v727
        %771 = vmatpush1.msra.mxu0 %v726
        %772 = vmatprep.subr.mxu0 %v729
        %773 = vmatpush1.msra.mxu0 %v728
        %774 = vmatprep.subr.mxu0 %v731
        %775 = vmatpush1.msra.mxu0 %v730
        %776 = vmatprep.subr.mxu0 %v733
        %777 = vmatpush1.msra.mxu0 %v732
        %778 = vmatprep.subr.mxu0 %v735
        %779 = vmatpush1.msra.mxu0 %v734
        %780 = vmatprep.subr.mxu0 %v737
        %781 = vmatpush1.msra.mxu0 %v736
        %782 = vmatprep.subr.mxu0 %v739
        %783 = vmatpush1.msra.mxu0 %v738
        %784 = vmatprep.subr.mxu0 %v741
        %785 = vmatpush1.msra.mxu0 %v740
        %786 = vmatprep.subr.mxu0 0.0
        %787 = vmatpush1.msra.mxu0 0.0
        %788 = vmatprep.subr.mxu0 0.0
        %789 = vmatpush1.msra.mxu0 0.0
        %790 = vmatprep.subr.mxu0 0.0
        %791 = vmatpush1.msra.mxu0 0.0
        %792 = vmatprep.subr.mxu0 0.0
        %793 = vmatpush1.msra.mxu0 0.0
        %794 = vmatprep.subr.mxu0 0.0
        %795 = vmatpush1.msra.mxu0 0.0
        %796 = vmatprep.subr.mxu0 0.0
        %797 = vmatpush1.msra.mxu0 0.0
        %798 = vmatprep.subr.mxu0 0.0
        %799 = vmatpush1.msra.mxu0 0.0
        %800 = vmatprep.subr.mxu0 0.0
        %801 = vmatpush1.msra.mxu0 0.0
        %802 = vmatprep.subr.mxu0 0.0
        %803 = vmatpush1.msra.mxu0 0.0
        %804 = vmatprep.subr.mxu0 0.0
        %805 = vmatpush1.msra.mxu0 0.0
        %806 = vmatprep.subr.mxu0 0.0
        %807 = vmatpush1.msra.mxu0 0.0
        %808 = vmatprep.subr.mxu0 0.0
        %809 = vmatpush1.msra.mxu0 0.0
        %810 = vmatprep.subr.mxu0 0.0
        %811 = vmatpush1.msra.mxu0 0.0
        %812 = vmatprep.subr.mxu0 0.0
        %813 = vmatpush1.msra.mxu0 0.0
        %814 = vmatprep.subr.mxu0 0.0
        %815 = vmatpush1.msra.mxu0 0.0
        %816 = vmatprep.subr.mxu0 0.0
        %817 = vmatpush1.msra.mxu0 0.0
        %818 = vmatprep.mubr.f32.mxu0 0.0
        %819 = vmatmul.mubr.f32.gmra.mrb[0].mxu0 %v708
        %v820 = vpop.f32.mrb[0].mxu0
        %v821 = vadd.f32 %v747, %v820
        %v822 = vpop.f32.mrb[0].mxu0
        %v823 = vadd.f32 %v751, %v822
        %824 = vmatprep.mubr.f32.mxu0 0.0
        %825 = vmatmul.mubr.f32.gmra.mrb[0].mxu0 %v709
        %v826 = vpop.f32.mrb[0].mxu0
        %v827 = vadd.f32 %v747, %v826
        %v828 = vpop.f32.mrb[0].mxu0
        %v829 = vadd.f32 %v751, %v828
        %830 = vdwg.mxu0
        %v831 = vmax.f32 %v821, 0.0
        %v832 = vmax.f32 %v823, 0.0
        %v833 = vmax.f32 %v827, 0.0
        %v834 = vmax.f32 %v829, 0.0
        %v835 = vld [vmem:[#allocation2] sm:$0x3]
        %v836 = vadd.f32 %v831, %v833
        %v837 = vrot.slane %v836, 4
        %v838 = vadd.f32 %v836, %v837
        %v839 = vrot.slane %v838, 2
        %v840 = vadd.f32 %v838, %v839
        %v841 = vrot.slane %v840, 1
        %v842 = vadd.f32 %v840, %v841
        %v843 = vadd.f32 %v832, %v834
        %v844 = vrot.slane %v843, 4
        %v845 = vadd.f32 %v843, %v844
        %v846 = vrot.slane %v845, 2
        %v847 = vadd.f32 %v845, %v846
        %v848 = vrot.slane %v847, 1
        %v849 = vadd.f32 %v847, %v848
        %v852 = vcombine.low %v842, %v849
        %v854 = vunpack.c.l.s4 1966171168
        %v855 = vunpack.c.0.s8 %v854
        %v856 = vlaneseq
        %v857 = vshrl.u32 %v856, 7
        %v858 = vsub.s32 %v855, %v857
        %v859 = vrot.slane %v852, %v858
        %v861 = vunpack.c.l.s4 1966171168
        %v862 = vunpack.c.0.s8 %v861
        %v863 = vlaneseq
        %v864 = vshrl.u32 %v863, 7
        %v865 = vsub.s32 %v862, %v864
        %v866 = vrot.slane %v859, %v865
        %v868 = vadd.f32 %v835, %v866
        %v869 = vlaneseq
        %vm870 = vcmp.ge.s32.totalorder %v869, 0
        %vm871 = vcmp.lt.s32.totalorder %v869, 256
        %vm872 = vmand %vm870, %vm871
        %873 = vst.msk [vmem:[#allocation2] sm:$0x3] %vm872, %v868
        // Predicated region
        $region81: #{tpu_custom_call.1} parent=67 // pred_check
          %p874 = pneg %p492
        $region82: #{tpu_custom_call.1} parent=67 // pred_check_branch
          %876 = sbr.rel (%p874) target = $region84
        $region83: #{tpu_custom_call.1} parent=67 // pred_region
          %v877 = vld [vmem:[#allocation2] sm:$0x3]
          %v878 = vmul.f32 %v877, 0.0625
          %v879 = vld [vmem:[#allocation6] sm:$0xff]
          %v880 = vld [vmem:[#allocation6 + $0x8] sm:$0xff]
          %v881 = vld [vmem:[#allocation6 + $0x10] sm:$0xff]
          %v882 = vld [vmem:[#allocation6 + $0x18] sm:$0xff]
          %v883 = vld [vmem:[#allocation6 + $0x20] sm:$0xff]
          %v884 = vld [vmem:[#allocation6 + $0x28] sm:$0xff]
          %v885 = vld [vmem:[#allocation6 + $0x30] sm:$0xff]
          %v886 = vld [vmem:[#allocation6 + $0x38] sm:$0xff]
          %v887 = vld [vmem:[#allocation6 + $0x40] sm:$0xff]
          %v888 = vld [vmem:[#allocation6 + $0x48] sm:$0xff]
          %v889 = vld [vmem:[#allocation6 + $0x50] sm:$0xff]
          %v890 = vld [vmem:[#allocation6 + $0x58] sm:$0xff]
          %v891 = vld [vmem:[#allocation6 + $0x60] sm:$0xff]
          %v892 = vld [vmem:[#allocation6 + $0x68] sm:$0xff]
          %v893 = vld [vmem:[#allocation6 + $0x70] sm:$0xff]
          %v894 = vld [vmem:[#allocation6 + $0x78] sm:$0xff]
          %v895 = vld [vmem:[#allocation6 + $0x80] sm:$0xff]
          %v896 = vld [vmem:[#allocation6 + $0x88] sm:$0xff]
          %v897 = vld [vmem:[#allocation6 + $0x90] sm:$0xff]
          %v898 = vld [vmem:[#allocation6 + $0x98] sm:$0xff]
          %v899 = vld [vmem:[#allocation6 + $0xa0] sm:$0xff]
          %v900 = vld [vmem:[#allocation6 + $0xa8] sm:$0xff]
          %v901 = vld [vmem:[#allocation6 + $0xb0] sm:$0xff]
          %v902 = vld [vmem:[#allocation6 + $0xb8] sm:$0xff]
          %v903 = vld [vmem:[#allocation6 + $0xc0] sm:$0xff]
          %v904 = vld [vmem:[#allocation6 + $0xc8] sm:$0xff]
          %v905 = vld [vmem:[#allocation6 + $0xd0] sm:$0xff]
          %v906 = vld [vmem:[#allocation6 + $0xd8] sm:$0xff]
          %v907 = vld [vmem:[#allocation6 + $0xe0] sm:$0xff]
          %v908 = vld [vmem:[#allocation6 + $0xe8] sm:$0xff]
          %v909 = vld [vmem:[#allocation6 + $0xf0] sm:$0xff]
          %v910 = vld [vmem:[#allocation6 + $0xf8] sm:$0xff]
          %v911 = vld [vmem:[%s9] sm:$0x1]
          %v913 = vlaneseq
          %v914 = vshrl.u32 %v913, 7
          %v915 = vsub.s32 0, %v914
          %v916 = vrot.slane %v878, %v915
          %v917 = vlaneseq
          %v918 = vshrl.u32 %v917, 7
          %v919 = vsub.s32 1, %v918
          %v920 = vrot.slane %v878, %v919
          %923 = vmatprep.subr.mxu0 0.0
          %924 = vmatpush1.msra.mxu0 %v879
          %925 = vmatprep.subr.mxu0 0.0
          %926 = vmatpush1.msra.mxu0 %v880
          %927 = vmatprep.subr.mxu0 0.0
          %928 = vmatpush1.msra.mxu0 %v881
          %929 = vmatprep.subr.mxu0 0.0
          %930 = vmatpush1.msra.mxu0 %v882
          %931 = vmatprep.subr.mxu0 0.0
          %932 = vmatpush1.msra.mxu0 %v883
          %933 = vmatprep.subr.mxu0 0.0
          %934 = vmatpush1.msra.mxu0 %v884
          %935 = vmatprep.subr.mxu0 0.0
          %936 = vmatpush1.msra.mxu0 %v885
          %937 = vmatprep.subr.mxu0 0.0
          %938 = vmatpush1.msra.mxu0 %v886
          %939 = vmatprep.subr.mxu0 0.0
          %940 = vmatpush1.msra.mxu0 %v887
          %941 = vmatprep.subr.mxu0 0.0
          %942 = vmatpush1.msra.mxu0 %v888
          %943 = vmatprep.subr.mxu0 0.0
          %944 = vmatpush1.msra.mxu0 %v889
          %945 = vmatprep.subr.mxu0 0.0
          %946 = vmatpush1.msra.mxu0 %v890
          %947 = vmatprep.subr.mxu0 0.0
          %948 = vmatpush1.msra.mxu0 %v891
          %949 = vmatprep.subr.mxu0 0.0
          %950 = vmatpush1.msra.mxu0 %v892
          %951 = vmatprep.subr.mxu0 0.0
          %952 = vmatpush1.msra.mxu0 %v893
          %953 = vmatprep.subr.mxu0 0.0
          %954 = vmatpush1.msra.mxu0 %v894
          %955 = vmatprep.subr.mxu0 0.0
          %956 = vmatpush1.msra.mxu0 %v895
          %957 = vmatprep.subr.mxu0 0.0
          %958 = vmatpush1.msra.mxu0 %v896
          %959 = vmatprep.subr.mxu0 0.0
          %960 = vmatpush1.msra.mxu0 %v897
          %961 = vmatprep.subr.mxu0 0.0
          %962 = vmatpush1.msra.mxu0 %v898
          %963 = vmatprep.subr.mxu0 0.0
          %964 = vmatpush1.msra.mxu0 %v899
          %965 = vmatprep.subr.mxu0 0.0
          %966 = vmatpush1.msra.mxu0 %v900
          %967 = vmatprep.subr.mxu0 0.0
          %968 = vmatpush1.msra.mxu0 %v901
          %969 = vmatprep.subr.mxu0 0.0
          %970 = vmatpush1.msra.mxu0 %v902
          %971 = vmatprep.subr.mxu0 0.0
          %972 = vmatpush1.msra.mxu0 %v903
          %973 = vmatprep.subr.mxu0 0.0
          %974 = vmatpush1.msra.mxu0 %v904
          %975 = vmatprep.subr.mxu0 0.0
          %976 = vmatpush1.msra.mxu0 %v905
          %977 = vmatprep.subr.mxu0 0.0
          %978 = vmatpush1.msra.mxu0 %v906
          %979 = vmatprep.subr.mxu0 0.0
          %980 = vmatpush1.msra.mxu0 %v907
          %981 = vmatprep.subr.mxu0 0.0
          %982 = vmatpush1.msra.mxu0 %v908
          %983 = vmatprep.subr.mxu0 0.0
          %984 = vmatpush1.msra.mxu0 %v909
          %985 = vmatprep.subr.mxu0 0.0
          %986 = vmatpush1.msra.mxu0 %v910
          %987 = vmatprep.mubr.f32.mxu0 %v920
          %988 = vmatmul.mubr.f32.gmra.mrb[0].mxu0 %v916
          %v989 = vpop.f32.mrb[0].mxu0
          %v990 = vadd.f32 %v911, %v989
          %v991 = vpop.f32.mrb[0].mxu0
          %992 = vdwg.mxu0
          %v993 = vmax.f32 %v990, 0.0
          %v994 = vld [vmem:[%s10] sm:$0xff]
          %v995 = vld [vmem:[%s10 + $0x8] sm:$0xff]
          %v996 = vld [vmem:[%s10 + $0x10] sm:$0xff]
          %v997 = vld [vmem:[%s10 + $0x18] sm:$0xff]
          %v998 = vld [vmem:[%s10 + $0x20] sm:$0xff]
          %v999 = vld [vmem:[%s10 + $0x28] sm:$0xff]
          %v1000 = vld [vmem:[%s10 + $0x30] sm:$0xff]
          %v1001 = vld [vmem:[%s10 + $0x38] sm:$0xff]
          %v1002 = vld [vmem:[%s10 + $0x40] sm:$0xff]
          %v1003 = vld [vmem:[%s10 + $0x48] sm:$0xff]
          %v1004 = vld [vmem:[%s10 + $0x50] sm:$0xff]
          %v1005 = vld [vmem:[%s10 + $0x58] sm:$0xff]
          %v1006 = vld [vmem:[%s10 + $0x60] sm:$0xff]
          %v1007 = vld [vmem:[%s10 + $0x68] sm:$0xff]
          %v1008 = vld [vmem:[%s10 + $0x70] sm:$0xff]
          %v1009 = vld [vmem:[%s10 + $0x78] sm:$0xff]
          %v1010 = vld [vmem:[#allocation3] sm:$0x1]
          %1011 = vmatprep.subr.mxu0 0.0
          %1012 = vmatpush1.msra.mxu0 %v994
          %1013 = vmatprep.subr.mxu0 0.0
          %1014 = vmatpush1.msra.mxu0 %v995
          %1015 = vmatprep.subr.mxu0 0.0
          %1016 = vmatpush1.msra.mxu0 %v996
          %1017 = vmatprep.subr.mxu0 0.0
          %1018 = vmatpush1.msra.mxu0 %v997
          %1019 = vmatprep.subr.mxu0 0.0
          %1020 = vmatpush1.msra.mxu0 %v998
          %1021 = vmatprep.subr.mxu0 0.0
          %1022 = vmatpush1.msra.mxu0 %v999
          %1023 = vmatprep.subr.mxu0 0.0
          %1024 = vmatpush1.msra.mxu0 %v1000
          %1025 = vmatprep.subr.mxu0 0.0
          %1026 = vmatpush1.msra.mxu0 %v1001
          %1027 = vmatprep.subr.mxu0 0.0
          %1028 = vmatpush1.msra.mxu0 %v1002
          %1029 = vmatprep.subr.mxu0 0.0
          %1030 = vmatpush1.msra.mxu0 %v1003
          %1031 = vmatprep.subr.mxu0 0.0
          %1032 = vmatpush1.msra.mxu0 %v1004
          %1033 = vmatprep.subr.mxu0 0.0
          %1034 = vmatpush1.msra.mxu0 %v1005
          %1035 = vmatprep.subr.mxu0 0.0
          %1036 = vmatpush1.msra.mxu0 %v1006
          %1037 = vmatprep.subr.mxu0 0.0
          %1038 = vmatpush1.msra.mxu0 %v1007
          %1039 = vmatprep.subr.mxu0 0.0
          %1040 = vmatpush1.msra.mxu0 %v1008
          %1041 = vmatprep.subr.mxu0 0.0
          %1042 = vmatpush1.msra.mxu0 %v1009
          %1043 = vmatprep.subr.mxu0 0.0
          %1044 = vmatpush1.msra.mxu0 0.0
          %1045 = vmatprep.subr.mxu0 0.0
          %1046 = vmatpush1.msra.mxu0 0.0
          %1047 = vmatprep.subr.mxu0 0.0
          %1048 = vmatpush1.msra.mxu0 0.0
          %1049 = vmatprep.subr.mxu0 0.0
          %1050 = vmatpush1.msra.mxu0 0.0
          %1051 = vmatprep.subr.mxu0 0.0
          %1052 = vmatpush1.msra.mxu0 0.0
          %1053 = vmatprep.subr.mxu0 0.0
          %1054 = vmatpush1.msra.mxu0 0.0
          %1055 = vmatprep.subr.mxu0 0.0
          %1056 = vmatpush1.msra.mxu0 0.0
          %1057 = vmatprep.subr.mxu0 0.0
          %1058 = vmatpush1.msra.mxu0 0.0
          %1059 = vmatprep.subr.mxu0 0.0
          %1060 = vmatpush1.msra.mxu0 0.0
          %1061 = vmatprep.subr.mxu0 0.0
          %1062 = vmatpush1.msra.mxu0 0.0
          %1063 = vmatprep.subr.mxu0 0.0
          %1064 = vmatpush1.msra.mxu0 0.0
          %1065 = vmatprep.subr.mxu0 0.0
          %1066 = vmatpush1.msra.mxu0 0.0
          %1067 = vmatprep.subr.mxu0 0.0
          %1068 = vmatpush1.msra.mxu0 0.0
          %1069 = vmatprep.subr.mxu0 0.0
          %1070 = vmatpush1.msra.mxu0 0.0
          %1071 = vmatprep.subr.mxu0 0.0
          %1072 = vmatpush1.msra.mxu0 0.0
          %1073 = vmatprep.subr.mxu0 0.0
          %1074 = vmatpush1.msra.mxu0 0.0
          %1075 = vmatprep.mubr.f32.mxu0 0.0
          %1076 = vmatmul.mubr.f32.gmra.mrb[0].mxu0 %v993
          %v1077 = vpop.f32.mrb[0].mxu0
          %v1078 = vadd.f32 %v1010, %v1077
          %v1079 = vpop.f32.mrb[0].mxu0
          %1080 = vdwg.mxu0
          %vm1081 = vcmask 0
          %1082 = vst.msk [vmem:[%s491] sm:$0x1] %vm1081, %v1078
        $region84: #{tpu_custom_call.1} parent=67 // pred_fallthru
          _
        %p1083 = scmp.lt.s32.totalorder %s31, 1
        %s1084 = scalar_select %p1083, %s31, 1
        %s1085 = scalar_lea.vmem %s12, %s1084
        // Predicated region
        $region85: #{tpu_custom_call.1} parent=67 // pred_check
          %p1086 = pneg %p321
        $region86: #{tpu_custom_call.1} parent=67 // pred_check_branch
          %1088 = sbr.rel (%p1086) target = $region88
        $region87: #{tpu_custom_call.1} parent=67 // pred_region
          _
        $region88: #{tpu_custom_call.1} parent=67 // pred_fallthru
          _
      $region68: #{tpu_custom_call.1} parent=5 // pred_fallthru
        _
      %p1089 = scmp.le.s32.totalorder 2, %s22
      // Predicated region
      $region89: #{tpu_custom_call.1} parent=5 // pred_check
        %p1090 = pneg %p1089
      $region90: #{tpu_custom_call.1} parent=5 // pred_check_branch
        %1092 = sbr.rel (%p1090) target = $region92
      $region91: #{tpu_custom_call.1} parent=5 // pred_region
        %s1093 = ssub.s32 %s22, 2
        // Predicated region
        $region93: #{tpu_custom_call.1} parent=91 // pred_check
          %p1094 = pneg %p327
        $region94: #{tpu_custom_call.1} parent=91 // pred_check_branch
          %1096 = sbr.rel (%p1094) target = $region96
        $region95: #{tpu_custom_call.1} parent=91 // pred_region
          %p1097 = scmp.lt.s32.totalorder %s33, 1
          %s1098 = scalar_select %p1097, %s33, 1
          %s1099 = scalar_lea.vmem %s12, %s1098
        $region96: #{tpu_custom_call.1} parent=91 // pred_fallthru
          _
      $region92: #{tpu_custom_call.1} parent=5 // pred_fallthru
        _
    $region6: #{tpu_custom_call.1} parent=1 // loop_footer
      %s26 = sadd.s32 1, %s22
    $region7: #{tpu_custom_call.1} parent=1 // loop_footer_branch
      %21 = sbr.rel target = $region3
    $region8: #{tpu_custom_call.1} parent=1 // loop_exit
      _
    %1100 = vsyncpa [#allocation5], 1
    %s1101 = scalar_lea.sflag [#allocation5], 1
    %1102 = vsyncpa %s1101, 1
    %1103 = vsyncpa [#allocation7], 1

</llo_original>
